<compile_context>
chip_gen: v6e
topology: v6e:2x2x1
jax: 0.10.0
libtpu: 0.0.40
codegen_flags: <defaults>
</compile_context>

<pallas_src>
import math
from dataclasses import dataclass, field
from enum import Enum
from typing import Optional

import jax
import jax.numpy as jnp
from jax.experimental import pallas as pl
from jax.experimental.pallas import tpu as pltpu


# ----------------------------------------------------------------------------
# Synthetic action data structures (stand-ins for the original FJSP types).
# ----------------------------------------------------------------------------
class ActionType(Enum):
    wait = 0
    pick = 1
    transport = 2
    move = 3


@dataclass
class Product:
    operation_from: int
    operation_to: int


@dataclass
class Action:
    action_type: ActionType
    AGV_id: Optional[int] = None
    target_machine: Optional[int] = None
    target_product: Optional[Product] = None


@dataclass
class IdIdxMapper:
    AGV: dict = field(default_factory=dict)
    operation: dict = field(default_factory=dict)
    machine: dict = field(default_factory=dict)


LANE = 128      # TPU lane width
SUBLANE = 8     # f32 sublane count
ROW_TILE = 256  # row tile for large batches (multiple of 8, fills 256-row MXU)


def _round_up(x: int, m: int) -> int:
    return ((x + m - 1) // m) * m


# ----------------------------------------------------------------------------
# Pallas kernel: fused (Linear -> Tanh) x4 -> Linear over one encoder type and
# one row tile.  Scalar-prefetched per-encoder row counts gate dead tiles.
# ----------------------------------------------------------------------------
def fused_mlp5_pallas(counts, x_all, stacked_params, *, row_tile):
    """counts: (3,) int32 live rows per encoder.
    x_all: (E=3, R, K_pad) f32 (R multiple of row_tile).
    stacked_params: (w1,b1,...,w5,b5), each with leading E axis (w in mxu
    dtype, b in f32).  Returns (E, R, D_pad) f32 in ONE pallas_call."""
    E, R, K = x_all.shape
    D = stacked_params[-2].shape[-1]
    assert R % row_tile == 0
    # two independent sub-tiles inside the kernel -> tanh(EUP) of one overlaps
    # the MXU matmul of the other.
    n_sub = 2 if (row_tile % 16 == 0) else 1
    sub = row_tile // n_sub

    def x_map(e, r, counts_ref):      # data / output move with both grid axes
        return (e, r, 0)

    def w_map(e, r, counts_ref):      # weights constant along row axis -> resident
        return (e, 0, 0)

    in_specs = [pl.BlockSpec((None, row_tile, K), x_map)]
    for p in stacked_params:
        in_specs.append(pl.BlockSpec((None,) + p.shape[1:], w_map))

    def kernel(counts_ref, x_ref, *rest):
        *params, o_ref = rest
        ws = params[0::2]
        bs = params[1::2]
        e = pl.program_id(0)
        r = pl.program_id(1)
        live = r * row_tile < counts_ref[e]

        @pl.when(live)
        def _():
            hs = [x_ref[pl.ds(s * sub, sub), :] for s in range(n_sub)]
            for li in range(4):
                w = ws[li][...]
                b = bs[li][...]
                zs = [jnp.dot(h.astype(w.dtype), w,
                              preferred_element_type=jnp.float32) + b
                      for h in hs]
                hs = [jnp.tanh(z) for z in zs]   # f32 elementwise (v5e-safe)
            w = ws[4][...]
            b = bs[4][...]
            for s in range(n_sub):
                o_ref[pl.ds(s * sub, sub), :] = (
                    jnp.dot(hs[s].astype(w.dtype), w,
                            preferred_element_type=jnp.float32) + b
                ).astype(o_ref.dtype)

        @pl.when(jnp.logical_not(live))
        def _():
            # dead tile (this encoder has no live rows here): deterministic zeros
            o_ref[...] = jnp.zeros_like(o_ref)

    grid_spec = pltpu.PrefetchScalarGridSpec(
        num_scalar_prefetch=1,
        grid=(E, R // row_tile),                  # E outer, rows inner (fastest)
        in_specs=in_specs,
        out_specs=pl.BlockSpec((None, row_tile, D), x_map),
    )
    return pl.pallas_call(
        kernel,
        out_shape=jax.ShapeDtypeStruct((E, R, D), jnp.float32),
        grid_spec=grid_spec,
        compiler_params=pltpu.CompilerParams(
            # rows axis is the one megacore shards (even split on v7x);
            # E=3 stays "arbitrary" to avoid a 2:1 core imbalance.
            dimension_semantics=("arbitrary", "parallel")),
    )(counts, x_all, *stacked_params)


# ----------------------------------------------------------------------------
# Parameter init (deterministic, PyTorch-Linear-like uniform init).
# ----------------------------------------------------------------------------
def _init_linear(key, fan_in, fan_out):
    kw, kb = jax.random.split(key)
    bound = 1.0 / math.sqrt(fan_in)
    w = jax.random.uniform(kw, (fan_in, fan_out), jnp.float32, -bound, bound)
    b = jax.random.uniform(kb, (fan_out,), jnp.float32, -bound, bound)
    return w, b


def _init_mlp(key, d_in, hidden, d_out):
    dims = [d_in, hidden, hidden, hidden, hidden, d_out]
    ws, bs = [], []
    for k, (a, b) in zip(jax.random.split(key, 5), zip(dims[:-1], dims[1:])):
        w, bb = _init_linear(k, a, b)
        ws.append(w)
        bs.append(bb)
    return ws, bs


def _mlp_ref(x, ws, bs):
    h = x
    for w, b in zip(ws[:-1], bs[:-1]):
        h = jnp.tanh(h @ w + b)
    return h @ ws[-1] + bs[-1]


# ----------------------------------------------------------------------------
# ActionEncoder (JAX / Pallas)
# ----------------------------------------------------------------------------
class ActionEncoder:
    def __init__(self, out_channels: int, node_channels, key,
                 mxu_dtype=jnp.float32):
        op_c, mach_c, agv_c = node_channels
        hidden = out_channels * 2
        k_pick, k_trans, k_move = jax.random.split(key, 3)

        self.out_channels = out_channels
        self.hidden = hidden
        self.mxu_dtype = mxu_dtype
        # nn.Parameter(torch.zeros(out_channels))
        self.wait_emb = jnp.zeros((out_channels,), jnp.float32)

        self.d_in = {
            "pick": agv_c + op_c + op_c + mach_c,
            "transport": mach_c + agv_c,
            "move": mach_c + agv_c,
        }
        # unpadded per-encoder params (used by the pure-JAX reference)
        self.pick_ws, self.pick_bs = _init_mlp(k_pick, self.d_in["pick"], hidden, out_channels)
        self.trans_ws, self.trans_bs = _init_mlp(k_trans, self.d_in["transport"], hidden, out_channels)
        self.move_ws, self.move_bs = _init_mlp(k_move, self.d_in["move"], hidden, out_channels)

        # ---- pack the three encoders into one stacked, zero-padded set ----
        self.k_pad = _round_up(max(self.d_in.values()), LANE)   # e.g. 52 -> 128
        self.d_pad = _round_up(out_channels, LANE)               # e.g. 32 -> 128

        per_type = [
            (self.pick_ws, self.pick_bs, self.d_in["pick"]),
            (self.trans_ws, self.trans_bs, self.d_in["transport"]),
            (self.move_ws, self.move_bs, self.d_in["move"]),
        ]

        stacked = []
        for layer in range(5):
            if layer == 0:
                w_stack = jnp.zeros((3, self.k_pad, hidden), jnp.float32)
                for e, (ws_, _, din) in enumerate(per_type):
                    w_stack = w_stack.at[e, :din, :].set(ws_[0])
                b_stack = jnp.stack([bs_[0] for (_, bs_, _) in per_type]).reshape(3, 1, hidden)
            elif layer < 4:
                w_stack = jnp.stack([ws_[layer] for (ws_, _, _) in per_type])
                b_stack = jnp.stack([bs_[layer] for (_, bs_, _) in per_type]).reshape(3, 1, hidden)
            else:
                w_stack = jnp.zeros((3, hidden, self.d_pad), jnp.float32)
                b_stack = jnp.zeros((3, 1, self.d_pad), jnp.float32)
                for e, (ws_, bs_, _) in enumerate(per_type):
                    w_stack = w_stack.at[e, :, :out_channels].set(ws_[4])
                    b_stack = b_stack.at[e, 0, :out_channels].set(bs_[4])
            # weights in MXU dtype (bf16 on v6e/v7x for 2x MXU throughput),
            # biases stay f32 (VPU add path).
            stacked.append(w_stack.astype(mxu_dtype))
            stacked.append(b_stack)
        self.stacked_params = tuple(stacked)

    # ------------------------------------------------------------------
    def forward(self, batch_actions, embeddings, offsets, idx_mappers):
        C = self.out_channels

        # --- host-side index building only (no per-action jnp ops) ---
        pick_idx = {"AGV": [], "op_from": [], "op_to": [], "machine": []}
        trans_idx = {"AGV": [], "machine": []}
        move_idx = {"AGV": [], "machine": []}
        tagged = []          # per flattened action: (type_code, row within type)
        batch_lens = []

        for i, (actions, mapper) in enumerate(zip(batch_actions, idx_mappers)):
            batch_lens.append(len(actions))
            for action in actions:
                if action.action_type is ActionType.wait:
                    tagged.append((0, 0))
                    continue
                agv = offsets["AGV"][i] + mapper.AGV[action.AGV_id]
                mch = offsets["machine"][i] + mapper.machine[action.target_machine]
                if action.action_type is ActionType.pick:
                    opf = offsets["operation"][i] + mapper.operation[action.target_product.operation_from]
                    opt = offsets["operation"][i] + mapper.operation[action.target_product.operation_to]
                    tagged.append((1, len(pick_idx["AGV"])))
                    pick_idx["AGV"].append(agv)
                    pick_idx["op_from"].append(opf)
                    pick_idx["op_to"].append(opt)
                    pick_idx["machine"].append(mch)
                elif action.action_type is ActionType.transport:
                    tagged.append((2, len(trans_idx["AGV"])))
                    trans_idx["AGV"].append(agv)
                    trans_idx["machine"].append(mch)
                else:  # move
                    tagged.append((3, len(move_idx["AGV"])))
                    move_idx["AGV"].append(agv)
                    move_idx["machine"].append(mch)

        n_pick = len(pick_idx["AGV"])
        n_trans = len(trans_idx["AGV"])
        n_move = len(move_idx["AGV"])
        n_total = sum(batch_lens)

        if n_pick + n_trans + n_move == 0:
            gathered = jnp.broadcast_to(self.wait_emb, (n_total, C))
        else:
            # --- row bucketing: pow2 (>=8) for small counts, row_tile-multiple
            #     for large counts (bounds recompiles, avoids ~2x dead rows) ---
            max_rows = max(n_pick, n_trans, n_move)
            if max_rows <= ROW_TILE:
                padded_rows = max(SUBLANE, int(pl.next_power_of_2(max_rows)))
                row_tile = padded_rows
            else:
                padded_rows = _round_up(max_rows, ROW_TILE)
                row_tile = ROW_TILE

            def take(name, idx):
                return jnp.take(embeddings[name], jnp.asarray(idx, jnp.int32), axis=0)

            x_all = jnp.zeros((3, padded_rows, self.k_pad), jnp.float32)
            if n_pick:
                px = jnp.concatenate(
                    [take("AGV", pick_idx["AGV"]),
                     take("operation", pick_idx["op_from"]),
                     take("operation", pick_idx["op_to"]),
                     take("machine", pick_idx["machine"])], axis=1)
                x_all = x_all.at[0, :n_pick, : self.d_in["pick"]].set(px)
            if n_trans:
                tx = jnp.concatenate(
                    [take("AGV", trans_idx["AGV"]),
                     take("machine", trans_idx["machine"])], axis=1)
                x_all = x_all.at[1, :n_trans, : self.d_in["transport"]].set(tx)
            if n_move:
                mx = jnp.concatenate(
                    [take("AGV", move_idx["AGV"]),
                     take("machine", move_idx["machine"])], axis=1)
                x_all = x_all.at[2, :n_move, : self.d_in["move"]].set(mx)

            counts = jnp.asarray([n_pick, n_trans, n_move], jnp.int32)
            out = fused_mlp5_pallas(counts, x_all, self.stacked_params,
                                    row_tile=row_tile)

            # --- single gather from the padded output slab, wait rows via where ---
            slab = out.reshape(3 * padded_rows, self.d_pad)
            flat_idx, is_wait = [], []
            for t, k in tagged:
                if t == 0:
                    flat_idx.append(0)
                    is_wait.append(True)
                else:
                    flat_idx.append((t - 1) * padded_rows + k)
                    is_wait.append(False)
            gathered = jnp.take(slab, jnp.asarray(flat_idx, jnp.int32), axis=0)[:, :C]
            gathered = jnp.where(jnp.asarray(is_wait, bool)[:, None],
                                 self.wait_emb[None, :], gathered)

        # --- split per batch ---
        ret, start = [], 0
        for n in batch_lens:
            ret.append(gathered[start:start + n])
            start += n
        return ret

    __call__ = forward

    def single_action_encode(self, actions, embeddings, offsets, idx_mappers):
        return jnp.concatenate(
            self.forward([[a] for a in actions], embeddings, offsets, idx_mappers))


# ----------------------------------------------------------------------------
# Pure-JAX per-action reference (mirrors the original PyTorch loop).
# ----------------------------------------------------------------------------
def reference_forward(enc, batch_actions, embeddings, offsets, idx_mappers):
    ret = []
    for i, (actions, mapper) in enumerate(zip(batch_actions, idx_mappers)):
        rows = []
        for action in actions:
            if action.action_type is ActionType.wait:
                rows.append(enc.wait_emb)
                continue
            agv = embeddings["AGV"][offsets["AGV"][i] + mapper.AGV[action.AGV_id]]
            mch = embeddings["machine"][offsets["machine"][i] + mapper.machine[action.target_machine]]
            if action.action_type is ActionType.pick:
                opf = embeddings["operation"][
                    offsets["operation"][i] + mapper.operation[action.target_product.operation_from]]
                opt = embeddings["operation"][
                    offsets["operation"][i] + mapper.operation[action.target_product.operation_to]]
                rows.append(_mlp_ref(jnp.concatenate([agv, opf, opt, mch]), enc.pick_ws, enc.pick_bs))
            elif action.action_type is ActionType.transport:
                rows.append(_mlp_ref(jnp.concatenate([agv, mch]), enc.trans_ws, enc.trans_bs))
            else:
                rows.append(_mlp_ref(jnp.concatenate([agv, mch]), enc.move_ws, enc.move_bs))
        ret.append(jnp.stack(rows))
    return ret


# ----------------------------------------------------------------------------
# Main
# ----------------------------------------------------------------------------
if __name__ == "__main__":
    out_channels = 32
    node_channels = (16, 12, 8)  # (operation, machine, AGV)

    enc = ActionEncoder(out_channels, node_channels, jax.random.PRNGKey(0))

    kop, kma, kagv = jax.random.split(jax.random.PRNGKey(1), 3)
    embeddings = {
        "operation": jax.random.normal(kop, (10, node_channels[0]), jnp.float32),
        "machine": jax.random.normal(kma, (6, node_channels[1]), jnp.float32),
        "AGV": jax.random.normal(kagv, (4, node_channels[2]), jnp.float32),
    }
    offsets = {
        "operation": {0: 0, 1: 5},
        "machine": {0: 0, 1: 3},
        "AGV": {0: 0, 1: 2},
    }
    idx_mappers = [
        IdIdxMapper(AGV={10: 0, 11: 1},
                    operation={100: 0, 101: 1, 102: 2},
                    machine={1: 0, 2: 1, 3: 2}),
        IdIdxMapper(AGV={20: 0, 21: 1},
                    operation={200: 0, 201: 1},
                    machine={5: 0, 6: 1}),
    ]
    batch_actions = [
        [
            Action(ActionType.wait),
            Action(ActionType.pick, AGV_id=10, target_machine=2,
                   target_product=Product(100, 101)),
            Action(ActionType.transport, AGV_id=11, target_machine=3),
            Action(ActionType.move, AGV_id=10, target_machine=1),
        ],
        [
            Action(ActionType.pick, AGV_id=21, target_machine=6,
                   target_product=Product(200, 201)),
            Action(ActionType.wait),
            Action(ActionType.move, AGV_id=20, target_machine=5),
        ],
    ]

    # --- small mixed batch (exercises all three encoders + wait) ---
    out = enc(batch_actions, embeddings, offsets, idx_mappers)
    for r in out:
        jax.block_until_ready(r)
    ref = reference_forward(enc, batch_actions, embeddings, offsets, idx_mappers)
    for a, b in zip(out, ref):
        assert a.shape == b.shape
        assert jnp.allclose(a, b, atol=1e-3, rtol=1e-3), "mismatch vs reference (small batch)"

    # --- skewed batch: many picks, a few moves, zero transports.
    #     Exercises multi-row tiles + the dead-tile (pl.when) skip path. ---
    big_actions = []
    for j in range(20):
        big_actions.append(Action(ActionType.pick,
                                  AGV_id=10 + (j % 2),
                                  target_machine=[1, 2, 3][j % 3],
                                  target_product=Product(100 + (j % 3), 100 + ((j + 1) % 3))))
    for j in range(3):
        big_actions.append(Action(ActionType.move, AGV_id=11, target_machine=2))
    big_actions.append(Action(ActionType.wait))
    out2 = enc([big_actions], embeddings, offsets, [idx_mappers[0]])
    jax.block_until_ready(out2[0])
    ref2 = reference_forward(enc, [big_actions], embeddings, offsets, [idx_mappers[0]])
    assert jnp.allclose(out2[0], ref2[0], atol=1e-3, rtol=1e-3), "mismatch vs reference (skewed batch)"

    # --- bf16 MXU-operand variant (v6e/v7x fast path); elementwise stays f32 ---
    enc_bf16 = ActionEncoder(out_channels, node_channels, jax.random.PRNGKey(0),
                             mxu_dtype=jnp.bfloat16)
    out_bf = enc_bf16(batch_actions, embeddings, offsets, idx_mappers)
    for r in out_bf:
        jax.block_until_ready(r)
    for a, b in zip(out_bf, ref):
        assert a.shape == b.shape
        assert jnp.allclose(a, b, atol=5e-2, rtol=5e-2), "mismatch vs reference (bf16 MXU)"

    print("KERNEL_OK")
</pallas_src>

<mosaic_0001>
module attributes {stable_mosaic.version = 11 : i64} {
  func.func @kernel(%arg0: i32, %arg1: i32, %arg2: memref<3xi32, #tpu.memory_space<smem>>, %arg3: memref<1x8x128xf32, #tpu.memory_space<vmem>>, %arg4: memref<1x128x64xf32, #tpu.memory_space<vmem>>, %arg5: memref<1x1x64xf32, #tpu.memory_space<vmem>>, %arg6: memref<1x64x64xf32, #tpu.memory_space<vmem>>, %arg7: memref<1x1x64xf32, #tpu.memory_space<vmem>>, %arg8: memref<1x64x64xf32, #tpu.memory_space<vmem>>, %arg9: memref<1x1x64xf32, #tpu.memory_space<vmem>>, %arg10: memref<1x64x64xf32, #tpu.memory_space<vmem>>, %arg11: memref<1x1x64xf32, #tpu.memory_space<vmem>>, %arg12: memref<1x64x128xf32, #tpu.memory_space<vmem>>, %arg13: memref<1x1x128xf32, #tpu.memory_space<vmem>>, %arg14: memref<1x8x128xf32, #tpu.memory_space<vmem>>) attributes {dimension_semantics = [#tpu.dimension_semantics<arbitrary>, #tpu.dimension_semantics<parallel>], iteration_bounds = array<i64: 3, 1>, scalar_prefetch = 1 : i64, scratch_operands = 0 : i64, tpu.core_type = #tpu.core_type<tc>, window_params = [{transform_indices = @transform_0, window_bounds = array<i64: 1, 8, 128>}, {transform_indices = @transform_1, window_bounds = array<i64: 1, 128, 64>}, {transform_indices = @transform_2, window_bounds = array<i64: 1, 1, 64>}, {transform_indices = @transform_3, window_bounds = array<i64: 1, 64, 64>}, {transform_indices = @transform_4, window_bounds = array<i64: 1, 1, 64>}, {transform_indices = @transform_5, window_bounds = array<i64: 1, 64, 64>}, {transform_indices = @transform_6, window_bounds = array<i64: 1, 1, 64>}, {transform_indices = @transform_7, window_bounds = array<i64: 1, 64, 64>}, {transform_indices = @transform_8, window_bounds = array<i64: 1, 1, 64>}, {transform_indices = @transform_9, window_bounds = array<i64: 1, 64, 128>}, {transform_indices = @transform_10, window_bounds = array<i64: 1, 1, 128>}, {transform_indices = @transform_11, window_bounds = array<i64: 1, 8, 128>}]} {
    %c8_i32 = arith.constant 8 : i32
    %0 = arith.muli %arg1, %c8_i32 : i32
    %1 = arith.index_cast %arg0 : i32 to index
    %2 = memref.load %arg2[%1] : memref<3xi32, #tpu.memory_space<smem>>
    %3 = arith.cmpi slt, %0, %2 : i32
    %4 = arith.extui %3 : i1 to i32
    %c0_i32 = arith.constant 0 : i32
    %5 = arith.cmpi ne, %4, %c0_i32 : i32
    scf.if %5 {
      %c0 = arith.constant 0 : index
      %c0_1 = arith.constant 0 : index
      %c0_2 = arith.constant 0 : index
      %9 = vector.load %arg3[%c0, %c0_1, %c0_2] : memref<1x8x128xf32, #tpu.memory_space<vmem>>, vector<1x8x128xf32>
      %10 = vector.shape_cast %9 : vector<1x8x128xf32> to vector<8x128xf32>
      %c0_3 = arith.constant 0 : index
      %c0_4 = arith.constant 0 : index
      %c0_5 = arith.constant 0 : index
      %11 = vector.load %arg4[%c0_3, %c0_4, %c0_5] : memref<1x128x64xf32, #tpu.memory_space<vmem>>, vector<1x128x64xf32>
      %12 = vector.shape_cast %11 : vector<1x128x64xf32> to vector<128x64xf32>
      %c0_6 = arith.constant 0 : index
      %c0_7 = arith.constant 0 : index
      %c0_8 = arith.constant 0 : index
      %13 = vector.load %arg5[%c0_6, %c0_7, %c0_8] : memref<1x1x64xf32, #tpu.memory_space<vmem>>, vector<1x1x64xf32>
      %14 = vector.shape_cast %13 : vector<1x1x64xf32> to vector<1x64xf32>
      %cst = arith.constant dense<0.000000e+00> : vector<8x64xf32>
      %15 = tpu.matmul %10, %12, %cst {dimension_numbers = #tpu.dot_dimension_numbers<[1], [0], [0], [1], [0, 0, 1, 1], [], []>} : vector<8x128xf32>, vector<128x64xf32>, vector<8x64xf32> -> vector<8x64xf32>
      %16 = vector.broadcast %14 : vector<1x64xf32> to vector<8x64xf32>
      %17 = arith.addf %15, %16 : vector<8x64xf32>
      %18 = math.tanh %17 : vector<8x64xf32>
      %c0_9 = arith.constant 0 : index
      %c0_10 = arith.constant 0 : index
      %c0_11 = arith.constant 0 : index
      %19 = vector.load %arg6[%c0_9, %c0_10, %c0_11] : memref<1x64x64xf32, #tpu.memory_space<vmem>>, vector<1x64x64xf32>
      %20 = vector.shape_cast %19 : vector<1x64x64xf32> to vector<64x64xf32>
      %c0_12 = arith.constant 0 : index
      %c0_13 = arith.constant 0 : index
      %c0_14 = arith.constant 0 : index
      %21 = vector.load %arg7[%c0_12, %c0_13, %c0_14] : memref<1x1x64xf32, #tpu.memory_space<vmem>>, vector<1x1x64xf32>
      %22 = vector.shape_cast %21 : vector<1x1x64xf32> to vector<1x64xf32>
      %cst_15 = arith.constant dense<0.000000e+00> : vector<8x64xf32>
      %23 = tpu.matmul %18, %20, %cst_15 {dimension_numbers = #tpu.dot_dimension_numbers<[1], [0], [0], [1], [0, 0, 1, 1], [], []>} : vector<8x64xf32>, vector<64x64xf32>, vector<8x64xf32> -> vector<8x64xf32>
      %24 = vector.broadcast %22 : vector<1x64xf32> to vector<8x64xf32>
      %25 = arith.addf %23, %24 : vector<8x64xf32>
      %26 = math.tanh %25 : vector<8x64xf32>
      %c0_16 = arith.constant 0 : index
      %c0_17 = arith.constant 0 : index
      %c0_18 = arith.constant 0 : index
      %27 = vector.load %arg8[%c0_16, %c0_17, %c0_18] : memref<1x64x64xf32, #tpu.memory_space<vmem>>, vector<1x64x64xf32>
      %28 = vector.shape_cast %27 : vector<1x64x64xf32> to vector<64x64xf32>
      %c0_19 = arith.constant 0 : index
      %c0_20 = arith.constant 0 : index
      %c0_21 = arith.constant 0 : index
      %29 = vector.load %arg9[%c0_19, %c0_20, %c0_21] : memref<1x1x64xf32, #tpu.memory_space<vmem>>, vector<1x1x64xf32>
      %30 = vector.shape_cast %29 : vector<1x1x64xf32> to vector<1x64xf32>
      %cst_22 = arith.constant dense<0.000000e+00> : vector<8x64xf32>
      %31 = tpu.matmul %26, %28, %cst_22 {dimension_numbers = #tpu.dot_dimension_numbers<[1], [0], [0], [1], [0, 0, 1, 1], [], []>} : vector<8x64xf32>, vector<64x64xf32>, vector<8x64xf32> -> vector<8x64xf32>
      %32 = vector.broadcast %30 : vector<1x64xf32> to vector<8x64xf32>
      %33 = arith.addf %31, %32 : vector<8x64xf32>
      %34 = math.tanh %33 : vector<8x64xf32>
      %c0_23 = arith.constant 0 : index
      %c0_24 = arith.constant 0 : index
      %c0_25 = arith.constant 0 : index
      %35 = vector.load %arg10[%c0_23, %c0_24, %c0_25] : memref<1x64x64xf32, #tpu.memory_space<vmem>>, vector<1x64x64xf32>
      %36 = vector.shape_cast %35 : vector<1x64x64xf32> to vector<64x64xf32>
      %c0_26 = arith.constant 0 : index
      %c0_27 = arith.constant 0 : index
      %c0_28 = arith.constant 0 : index
      %37 = vector.load %arg11[%c0_26, %c0_27, %c0_28] : memref<1x1x64xf32, #tpu.memory_space<vmem>>, vector<1x1x64xf32>
      %38 = vector.shape_cast %37 : vector<1x1x64xf32> to vector<1x64xf32>
      %cst_29 = arith.constant dense<0.000000e+00> : vector<8x64xf32>
      %39 = tpu.matmul %34, %36, %cst_29 {dimension_numbers = #tpu.dot_dimension_numbers<[1], [0], [0], [1], [0, 0, 1, 1], [], []>} : vector<8x64xf32>, vector<64x64xf32>, vector<8x64xf32> -> vector<8x64xf32>
      %40 = vector.broadcast %38 : vector<1x64xf32> to vector<8x64xf32>
      %41 = arith.addf %39, %40 : vector<8x64xf32>
      %42 = math.tanh %41 : vector<8x64xf32>
      %c0_30 = arith.constant 0 : index
      %c0_31 = arith.constant 0 : index
      %c0_32 = arith.constant 0 : index
      %43 = vector.load %arg12[%c0_30, %c0_31, %c0_32] : memref<1x64x128xf32, #tpu.memory_space<vmem>>, vector<1x64x128xf32>
      %44 = vector.shape_cast %43 : vector<1x64x128xf32> to vector<64x128xf32>
      %c0_33 = arith.constant 0 : index
      %c0_34 = arith.constant 0 : index
      %c0_35 = arith.constant 0 : index
      %45 = vector.load %arg13[%c0_33, %c0_34, %c0_35] : memref<1x1x128xf32, #tpu.memory_space<vmem>>, vector<1x1x128xf32>
      %46 = vector.shape_cast %45 : vector<1x1x128xf32> to vector<1x128xf32>
      %cst_36 = arith.constant dense<0.000000e+00> : vector<8x128xf32>
      %47 = tpu.matmul %42, %44, %cst_36 {dimension_numbers = #tpu.dot_dimension_numbers<[1], [0], [0], [1], [0, 0, 1, 1], [], []>} : vector<8x64xf32>, vector<64x128xf32>, vector<8x128xf32> -> vector<8x128xf32>
      %48 = vector.broadcast %46 : vector<1x128xf32> to vector<8x128xf32>
      %49 = arith.addf %47, %48 : vector<8x128xf32>
      %c0_37 = arith.constant 0 : index
      %c0_38 = arith.constant 0 : index
      %c0_39 = arith.constant 0 : index
      %50 = vector.load %arg14[%c0_37, %c0_38, %c0_39] : memref<1x8x128xf32, #tpu.memory_space<vmem>>, vector<1x8x128xf32>
      %51 = vector.shape_cast %50 : vector<1x8x128xf32> to vector<8x128xf32>
      %52 = vector.shape_cast %49 : vector<8x128xf32> to vector<1x8x128xf32>
      tpu.vector_store %arg14[%c0_37, %c0_38, %c0_39], %52 {strides = array<i32>} : memref<1x8x128xf32, #tpu.memory_space<vmem>>, vector<1x8x128xf32>,
    } else {
    }
    %true = arith.constant true
    %6 = arith.xori %3, %true : i1
    %7 = arith.extui %6 : i1 to i32
    %c0_i32_0 = arith.constant 0 : i32
    %8 = arith.cmpi ne, %7, %c0_i32_0 : i32
    scf.if %8 {
      %cst = arith.constant 0.000000e+00 : f32
      %9 = vector.broadcast %cst : f32 to vector<8x128xf32>
      %c0 = arith.constant 0 : index
      %c0_1 = arith.constant 0 : index
      %c0_2 = arith.constant 0 : index
      %10 = vector.load %arg14[%c0, %c0_1, %c0_2] : memref<1x8x128xf32, #tpu.memory_space<vmem>>, vector<1x8x128xf32>
      %11 = vector.shape_cast %10 : vector<1x8x128xf32> to vector<8x128xf32>
      %12 = vector.shape_cast %9 : vector<8x128xf32> to vector<1x8x128xf32>
      tpu.vector_store %arg14[%c0, %c0_1, %c0_2], %12 {strides = array<i32>} : memref<1x8x128xf32, #tpu.memory_space<vmem>>, vector<1x8x128xf32>,
    } else {
    }
    return
  }
  func.func @transform_0(%arg0: i32, %arg1: i32, %arg2: memref<3xi32, #tpu.memory_space<smem>>) -> (i32, i32, i32) {
    %c0_i32 = arith.constant 0 : i32
    %c0_i32_0 = arith.constant 0 : i32
    return %arg0, %arg1, %c0_i32 : i32, i32, i32
  }
  func.func @transform_1(%arg0: i32, %arg1: i32, %arg2: memref<3xi32, #tpu.memory_space<smem>>) -> (i32, i32, i32) {
    %c0_i32 = arith.constant 0 : i32
    %c0_i32_0 = arith.constant 0 : i32
    %c0_i32_1 = arith.constant 0 : i32
    return %arg0, %c0_i32, %c0_i32_0 : i32, i32, i32
  }
  func.func @transform_2(%arg0: i32, %arg1: i32, %arg2: memref<3xi32, #tpu.memory_space<smem>>) -> (i32, i32, i32) {
    %c0_i32 = arith.constant 0 : i32
    %c0_i32_0 = arith.constant 0 : i32
    %c0_i32_1 = arith.constant 0 : i32
    return %arg0, %c0_i32, %c0_i32_0 : i32, i32, i32
  }
  func.func @transform_3(%arg0: i32, %arg1: i32, %arg2: memref<3xi32, #tpu.memory_space<smem>>) -> (i32, i32, i32) {
    %c0_i32 = arith.constant 0 : i32
    %c0_i32_0 = arith.constant 0 : i32
    %c0_i32_1 = arith.constant 0 : i32
    return %arg0, %c0_i32, %c0_i32_0 : i32, i32, i32
  }
  func.func @transform_4(%arg0: i32, %arg1: i32, %arg2: memref<3xi32, #tpu.memory_space<smem>>) -> (i32, i32, i32) {
    %c0_i32 = arith.constant 0 : i32
    %c0_i32_0 = arith.constant 0 : i32
    %c0_i32_1 = arith.constant 0 : i32
    return %arg0, %c0_i32, %c0_i32_0 : i32, i32, i32
  }
  func.func @transform_5(%arg0: i32, %arg1: i32, %arg2: memref<3xi32, #tpu.memory_space<smem>>) -> (i32, i32, i32) {
    %c0_i32 = arith.constant 0 : i32
    %c0_i32_0 = arith.constant 0 : i32
    %c0_i32_1 = arith.constant 0 : i32
    return %arg0, %c0_i32, %c0_i32_0 : i32, i32, i32
  }
  func.func @transform_6(%arg0: i32, %arg1: i32, %arg2: memref<3xi32, #tpu.memory_space<smem>>) -> (i32, i32, i32) {
    %c0_i32 = arith.constant 0 : i32
    %c0_i32_0 = arith.constant 0 : i32
    %c0_i32_1 = arith.constant 0 : i32
    return %arg0, %c0_i32, %c0_i32_0 : i32, i32, i32
  }
  func.func @transform_7(%arg0: i32, %arg1: i32, %arg2: memref<3xi32, #tpu.memory_space<smem>>) -> (i32, i32, i32) {
    %c0_i32 = arith.constant 0 : i32
    %c0_i32_0 = arith.constant 0 : i32
    %c0_i32_1 = arith.constant 0 : i32
    return %arg0, %c0_i32, %c0_i32_0 : i32, i32, i32
  }
  func.func @transform_8(%arg0: i32, %arg1: i32, %arg2: memref<3xi32, #tpu.memory_space<smem>>) -> (i32, i32, i32) {
    %c0_i32 = arith.constant 0 : i32
    %c0_i32_0 = arith.constant 0 : i32
    %c0_i32_1 = arith.constant 0 : i32
    return %arg0, %c0_i32, %c0_i32_0 : i32, i32, i32
  }
  func.func @transform_9(%arg0: i32, %arg1: i32, %arg2: memref<3xi32, #tpu.memory_space<smem>>) -> (i32, i32, i32) {
    %c0_i32 = arith.constant 0 : i32
    %c0_i32_0 = arith.constant 0 : i32
    %c0_i32_1 = arith.constant 0 : i32
    return %arg0, %c0_i32, %c0_i32_0 : i32, i32, i32
  }
  func.func @transform_10(%arg0: i32, %arg1: i32, %arg2: memref<3xi32, #tpu.memory_space<smem>>) -> (i32, i32, i32) {
    %c0_i32 = arith.constant 0 : i32
    %c0_i32_0 = arith.constant 0 : i32
    %c0_i32_1 = arith.constant 0 : i32
    return %arg0, %c0_i32, %c0_i32_0 : i32, i32, i32
  }
  func.func @transform_11(%arg0: i32, %arg1: i32, %arg2: memref<3xi32, #tpu.memory_space<smem>>) -> (i32, i32, i32) {
    %c0_i32 = arith.constant 0 : i32
    %c0_i32_0 = arith.constant 0 : i32
    return %arg0, %arg1, %c0_i32 : i32, i32, i32
  }
}

</mosaic_0001>

<llo_original>
// kernel: tpu_custom_call.1
$region0: #{tpu_custom_call.1}
  #allocation0 [shape = 'u32[]', space=smem, size = 0x4, offset = 0x4, fixed_abs, tag = 'smem constant byte address 0x4 - core index']
  #allocation1 [shape = 'u32[144,128]{1,0:T(1,128)}', space=vmem, size = 0x12000, scoped, tag = 'internal scratch']
  #allocation2 [shape = 's32[1]{0}', space=sflag, size = 0x4, scoped, tag = 'scoped memory for tpu_custom_call.1']
  #allocation3 [shape = 'u8[512]{0}', space=smem, size = 0x200, scoped, tag = 'prefetched SMEM operand 0']
  %s0 = inlined_call_operand.hbm [shape: s32[3], index: 0, kind: input, shape index: {}]
  %s1 = inlined_call_operand.hbm [shape: f32[3,8,128], index: 1, kind: input, shape index: {}]
  %s2 = inlined_call_operand.vmem [shape: f32[3,128,64], index: 2, kind: input, shape index: {}]
  %s3 = inlined_call_operand.hbm [shape: f32[3,1,64], index: 3, kind: input, shape index: {}]
  %s4 = inlined_call_operand.vmem [shape: f32[3,64,64], index: 4, kind: input, shape index: {}]
  %s5 = inlined_call_operand.vmem [shape: f32[3,1,64], index: 5, kind: input, shape index: {}]
  %s6 = inlined_call_operand.vmem [shape: f32[3,64,64], index: 6, kind: input, shape index: {}]
  %s7 = inlined_call_operand.vmem [shape: f32[3,1,64], index: 7, kind: input, shape index: {}]
  %s8 = inlined_call_operand.vmem [shape: f32[3,64,64], index: 8, kind: input, shape index: {}]
  %s9 = inlined_call_operand.vmem [shape: f32[3,1,64], index: 9, kind: input, shape index: {}]
  %s10 = inlined_call_operand.hbm [shape: f32[3,64,128], index: 10, kind: input, shape index: {}]
  %s11 = inlined_call_operand.vmem [shape: f32[3,1,128], index: 11, kind: input, shape index: {}]
  %s12 = inlined_call_operand.hbm [shape: f32[3,8,128], index: 12, kind: output, shape index: {}]
  %s13 = sld [smem:[#allocation0]]
  $region97: #{tpu_custom_call.1} parent=0
    _
  %s15 = ssub.s32 1, %s13
  %s16 = scalar_select 0, %s15, %s13
  %18 = dma.hbm_to_smem %s0, 16, [#allocation3], [#allocation2]
  %19 = dma.done [#allocation2], 16
  %20 = sfence
  $region1: #{tpu_custom_call.1} parent=0
    #allocation4 [shape = 'u8[8192]{0}', space=vmem, size = 0x2000, scoped, tag = 'input window, operand 1']
    #allocation5 [shape = 's32[2]{0}', space=sflag, size = 0x8, scoped, tag = 'scoped memory for tpu_custom_call.1']
    #allocation6 [shape = 's32[2]{0}', space=sflag, size = 0x8, scoped, tag = 'scoped memory for tpu_custom_call.1']
    #allocation7 [shape = 'u8[1024]{0}', space=vmem, size = 0x400, scoped, tag = 'input window, operand 3']
    #allocation8 [shape = 's32[2]{0}', space=sflag, size = 0x8, scoped, tag = 'scoped memory for tpu_custom_call.1']
    #allocation9 [shape = 'u8[65536]{0}', space=vmem, size = 0x10000, scoped, tag = 'input window, operand 10']
    #allocation10 [shape = 'u8[8192]{0}', space=vmem, size = 0x2000, scoped, tag = 'output window, operand 0']
    %21 = vsyncpa [#allocation5], 0
    %s22 = scalar_lea.sflag [#allocation5], 1
    %23 = vsyncpa %s22, 0
    %24 = vsyncpa [#allocation8], 0
    %s25 = scalar_lea.sflag [#allocation8], 1
    %26 = vsyncpa %s25, 0
    %27 = vsyncpa [#allocation6], 0
    %s28 = scalar_lea.sflag [#allocation6], 1
    %29 = vsyncpa %s28, 0
    loop: start=0, step=1, limit=5
    $region2: #{tpu_custom_call.1} parent=1 // loop_pre_header
      _
    $region3: #{tpu_custom_call.1} parent=1 // loop_header
      %s31 = sphi 0, %s35
      %p32 = scmp.ge.s32.totalorder %s31, 5
      %s38 = sphi 0, %s50
      %s39 = sphi 0, %s46
      %s40 = sphi 0, %s38
      %s41 = sphi 0, %s39
      %s42 = sphi 0, %s40
      %s43 = sphi 0, %s41
      %s55 = sphi 0, %s57
      %s58 = sphi 0, %s55
      %s59 = sphi 0, %s58
      %s75 = sphi 0, %s59
      %s81 = sphi 0, %s83
      %s84 = sphi 0, %s81
      %s85 = sphi 0, %s84
      %s101 = sphi 0, %s85
      %s107 = sphi 0, %s109
      %s110 = sphi 0, %s107
      %s111 = sphi 0, %s110
      %s127 = sphi 0, %s111
      %s133 = sphi 0, %s135
      %s136 = sphi 0, %s133
      %s137 = sphi 0, %s136
      %s153 = sphi 0, %s137
      %s159 = sphi 0, %s161
      %s162 = sphi 0, %s159
      %s163 = sphi 0, %s162
      %s179 = sphi 0, %s163
      %s185 = sphi 0, %s187
      %s188 = sphi 0, %s185
      %s189 = sphi 0, %s188
      %s205 = sphi 0, %s189
      %s211 = sphi 0, %s213
      %s214 = sphi 0, %s211
      %s215 = sphi 0, %s214
      %s231 = sphi 0, %s215
      %s237 = sphi 0, %s239
      %s240 = sphi 0, %s237
      %s241 = sphi 0, %s240
      %s257 = sphi 0, %s241
      %s263 = sphi 0, %s265
      %s266 = sphi 0, %s263
      %s267 = sphi 0, %s266
      %s283 = sphi 0, %s267
      %s289 = sphi 0, %s291
      %s292 = sphi 0, %s289
      %s293 = sphi 0, %s292
      %s309 = sphi 0, %s293
      %s315 = sphi 0, %s317
      %s318 = sphi 0, %s315
      %s319 = sphi 0, %s318
      %s335 = sphi 0, %s319
      %s343 = sphi 0, %s345
      %s346 = sphi 0, %s343
      %s347 = sphi 0, %s346
      %s363 = sphi 0, %s347
    $region4: #{tpu_custom_call.1} parent=1 // loop_header_branch
      %34 = sbr.rel (%p32) target = $region8
    $region5: #{tpu_custom_call.1} parent=1 // loop_body
      %s36 = ssub.s32 %s31, 1
      %s37 = ssub.s32 %s31, 2
      %s44 = sadd.s32 1, %s39
      %p45 = scmp.ge.s32.totalorder %s44, 1
      %s46 = scalar_select %p45, 0, %s44
      %s47 = sadd.s32 1, %s38
      %s48 = scalar_select %p45, %s47, %s38
      %p49 = scmp.ge.s32.totalorder %s48, 3
      %s50 = scalar_select %p49, 0, %s48
      %s51 = ssub.s32 %s38, %s50
      %s52 = ssub.s32 %s39, %s46
      %s53 = sor.u32 %s51, %s52
      %p54 = scmp.eq.s32.totalorder %s53, 0
      %s56 = sadd.s32 %s55, 1
      %s57 = scalar_select %p54, %s55, %s56
      %p60 = pneg %p54
      %p61 = scmp.eq.s32.totalorder %s31, 2
      %p62 = por %p60, %p61
      %p63 = scmp.ne.s32.totalorder %s55, %s58
      %p64 = scmp.eq.s32.totalorder %s31, 0
      %p65 = por %p63, %p64
      %p66 = scmp.ne.s32.totalorder %s55, %s58
      %p67 = scmp.eq.s32.totalorder %s36, 2
      %p68 = por %p66, %p67
      %p69 = scmp.ne.s32.totalorder %s58, %s59
      %p70 = scmp.eq.s32.totalorder %s36, 0
      %p71 = por %p69, %p70
      %p72 = scmp.ne.s32.totalorder %s58, %s59
      %p73 = scmp.eq.s32.totalorder %s37, 2
      %p74 = por %p72, %p73
      %p76 = scmp.ne.s32.totalorder %s59, %s75
      %p77 = scmp.eq.s32.totalorder %s37, 0
      %p78 = por %p76, %p77
      %s79 = ssub.s32 %s38, %s50
      %p80 = scmp.eq.s32.totalorder %s79, 0
      %s82 = sadd.s32 %s81, 1
      %s83 = scalar_select %p80, %s81, %s82
      %p86 = pneg %p80
      %p87 = scmp.eq.s32.totalorder %s31, 2
      %p88 = por %p86, %p87
      %p89 = scmp.ne.s32.totalorder %s81, %s84
      %p90 = scmp.eq.s32.totalorder %s31, 0
      %p91 = por %p89, %p90
      %p92 = scmp.ne.s32.totalorder %s81, %s84
      %p93 = scmp.eq.s32.totalorder %s36, 2
      %p94 = por %p92, %p93
      %p95 = scmp.ne.s32.totalorder %s84, %s85
      %p96 = scmp.eq.s32.totalorder %s36, 0
      %p97 = por %p95, %p96
      %p98 = scmp.ne.s32.totalorder %s84, %s85
      %p99 = scmp.eq.s32.totalorder %s37, 2
      %p100 = por %p98, %p99
      %p102 = scmp.ne.s32.totalorder %s85, %s101
      %p103 = scmp.eq.s32.totalorder %s37, 0
      %p104 = por %p102, %p103
      %s105 = ssub.s32 %s38, %s50
      %p106 = scmp.eq.s32.totalorder %s105, 0
      %s108 = sadd.s32 %s107, 1
      %s109 = scalar_select %p106, %s107, %s108
      %p112 = pneg %p106
      %p113 = scmp.eq.s32.totalorder %s31, 2
      %p114 = por %p112, %p113
      %p115 = scmp.ne.s32.totalorder %s107, %s110
      %p116 = scmp.eq.s32.totalorder %s31, 0
      %p117 = por %p115, %p116
      %p118 = scmp.ne.s32.totalorder %s107, %s110
      %p119 = scmp.eq.s32.totalorder %s36, 2
      %p120 = por %p118, %p119
      %p121 = scmp.ne.s32.totalorder %s110, %s111
      %p122 = scmp.eq.s32.totalorder %s36, 0
      %p123 = por %p121, %p122
      %p124 = scmp.ne.s32.totalorder %s110, %s111
      %p125 = scmp.eq.s32.totalorder %s37, 2
      %p126 = por %p124, %p125
      %p128 = scmp.ne.s32.totalorder %s111, %s127
      %p129 = scmp.eq.s32.totalorder %s37, 0
      %p130 = por %p128, %p129
      %s131 = ssub.s32 %s38, %s50
      %p132 = scmp.eq.s32.totalorder %s131, 0
      %s134 = sadd.s32 %s133, 1
      %s135 = scalar_select %p132, %s133, %s134
      %p138 = pneg %p132
      %p139 = scmp.eq.s32.totalorder %s31, 2
      %p140 = por %p138, %p139
      %p141 = scmp.ne.s32.totalorder %s133, %s136
      %p142 = scmp.eq.s32.totalorder %s31, 0
      %p143 = por %p141, %p142
      %p144 = scmp.ne.s32.totalorder %s133, %s136
      %p145 = scmp.eq.s32.totalorder %s36, 2
      %p146 = por %p144, %p145
      %p147 = scmp.ne.s32.totalorder %s136, %s137
      %p148 = scmp.eq.s32.totalorder %s36, 0
      %p149 = por %p147, %p148
      %p150 = scmp.ne.s32.totalorder %s136, %s137
      %p151 = scmp.eq.s32.totalorder %s37, 2
      %p152 = por %p150, %p151
      %p154 = scmp.ne.s32.totalorder %s137, %s153
      %p155 = scmp.eq.s32.totalorder %s37, 0
      %p156 = por %p154, %p155
      %s157 = ssub.s32 %s38, %s50
      %p158 = scmp.eq.s32.totalorder %s157, 0
      %s160 = sadd.s32 %s159, 1
      %s161 = scalar_select %p158, %s159, %s160
      %p164 = pneg %p158
      %p165 = scmp.eq.s32.totalorder %s31, 2
      %p166 = por %p164, %p165
      %p167 = scmp.ne.s32.totalorder %s159, %s162
      %p168 = scmp.eq.s32.totalorder %s31, 0
      %p169 = por %p167, %p168
      %p170 = scmp.ne.s32.totalorder %s159, %s162
      %p171 = scmp.eq.s32.totalorder %s36, 2
      %p172 = por %p170, %p171
      %p173 = scmp.ne.s32.totalorder %s162, %s163
      %p174 = scmp.eq.s32.totalorder %s36, 0
      %p175 = por %p173, %p174
      %p176 = scmp.ne.s32.totalorder %s162, %s163
      %p177 = scmp.eq.s32.totalorder %s37, 2
      %p178 = por %p176, %p177
      %p180 = scmp.ne.s32.totalorder %s163, %s179
      %p181 = scmp.eq.s32.totalorder %s37, 0
      %p182 = por %p180, %p181
      %s183 = ssub.s32 %s38, %s50
      %p184 = scmp.eq.s32.totalorder %s183, 0
      %s186 = sadd.s32 %s185, 1
      %s187 = scalar_select %p184, %s185, %s186
      %p190 = pneg %p184
      %p191 = scmp.eq.s32.totalorder %s31, 2
      %p192 = por %p190, %p191
      %p193 = scmp.ne.s32.totalorder %s185, %s188
      %p194 = scmp.eq.s32.totalorder %s31, 0
      %p195 = por %p193, %p194
      %p196 = scmp.ne.s32.totalorder %s185, %s188
      %p197 = scmp.eq.s32.totalorder %s36, 2
      %p198 = por %p196, %p197
      %p199 = scmp.ne.s32.totalorder %s188, %s189
      %p200 = scmp.eq.s32.totalorder %s36, 0
      %p201 = por %p199, %p200
      %p202 = scmp.ne.s32.totalorder %s188, %s189
      %p203 = scmp.eq.s32.totalorder %s37, 2
      %p204 = por %p202, %p203
      %p206 = scmp.ne.s32.totalorder %s189, %s205
      %p207 = scmp.eq.s32.totalorder %s37, 0
      %p208 = por %p206, %p207
      %s209 = ssub.s32 %s38, %s50
      %p210 = scmp.eq.s32.totalorder %s209, 0
      %s212 = sadd.s32 %s211, 1
      %s213 = scalar_select %p210, %s211, %s212
      %p216 = pneg %p210
      %p217 = scmp.eq.s32.totalorder %s31, 2
      %p218 = por %p216, %p217
      %p219 = scmp.ne.s32.totalorder %s211, %s214
      %p220 = scmp.eq.s32.totalorder %s31, 0
      %p221 = por %p219, %p220
      %p222 = scmp.ne.s32.totalorder %s211, %s214
      %p223 = scmp.eq.s32.totalorder %s36, 2
      %p224 = por %p222, %p223
      %p225 = scmp.ne.s32.totalorder %s214, %s215
      %p226 = scmp.eq.s32.totalorder %s36, 0
      %p227 = por %p225, %p226
      %p228 = scmp.ne.s32.totalorder %s214, %s215
      %p229 = scmp.eq.s32.totalorder %s37, 2
      %p230 = por %p228, %p229
      %p232 = scmp.ne.s32.totalorder %s215, %s231
      %p233 = scmp.eq.s32.totalorder %s37, 0
      %p234 = por %p232, %p233
      %s235 = ssub.s32 %s38, %s50
      %p236 = scmp.eq.s32.totalorder %s235, 0
      %s238 = sadd.s32 %s237, 1
      %s239 = scalar_select %p236, %s237, %s238
      %p242 = pneg %p236
      %p243 = scmp.eq.s32.totalorder %s31, 2
      %p244 = por %p242, %p243
      %p245 = scmp.ne.s32.totalorder %s237, %s240
      %p246 = scmp.eq.s32.totalorder %s31, 0
      %p247 = por %p245, %p246
      %p248 = scmp.ne.s32.totalorder %s237, %s240
      %p249 = scmp.eq.s32.totalorder %s36, 2
      %p250 = por %p248, %p249
      %p251 = scmp.ne.s32.totalorder %s240, %s241
      %p252 = scmp.eq.s32.totalorder %s36, 0
      %p253 = por %p251, %p252
      %p254 = scmp.ne.s32.totalorder %s240, %s241
      %p255 = scmp.eq.s32.totalorder %s37, 2
      %p256 = por %p254, %p255
      %p258 = scmp.ne.s32.totalorder %s241, %s257
      %p259 = scmp.eq.s32.totalorder %s37, 0
      %p260 = por %p258, %p259
      %s261 = ssub.s32 %s38, %s50
      %p262 = scmp.eq.s32.totalorder %s261, 0
      %s264 = sadd.s32 %s263, 1
      %s265 = scalar_select %p262, %s263, %s264
      %p268 = pneg %p262
      %p269 = scmp.eq.s32.totalorder %s31, 2
      %p270 = por %p268, %p269
      %p271 = scmp.ne.s32.totalorder %s263, %s266
      %p272 = scmp.eq.s32.totalorder %s31, 0
      %p273 = por %p271, %p272
      %p274 = scmp.ne.s32.totalorder %s263, %s266
      %p275 = scmp.eq.s32.totalorder %s36, 2
      %p276 = por %p274, %p275
      %p277 = scmp.ne.s32.totalorder %s266, %s267
      %p278 = scmp.eq.s32.totalorder %s36, 0
      %p279 = por %p277, %p278
      %p280 = scmp.ne.s32.totalorder %s266, %s267
      %p281 = scmp.eq.s32.totalorder %s37, 2
      %p282 = por %p280, %p281
      %p284 = scmp.ne.s32.totalorder %s267, %s283
      %p285 = scmp.eq.s32.totalorder %s37, 0
      %p286 = por %p284, %p285
      %s287 = ssub.s32 %s38, %s50
      %p288 = scmp.eq.s32.totalorder %s287, 0
      %s290 = sadd.s32 %s289, 1
      %s291 = scalar_select %p288, %s289, %s290
      %p294 = pneg %p288
      %p295 = scmp.eq.s32.totalorder %s31, 2
      %p296 = por %p294, %p295
      %p297 = scmp.ne.s32.totalorder %s289, %s292
      %p298 = scmp.eq.s32.totalorder %s31, 0
      %p299 = por %p297, %p298
      %p300 = scmp.ne.s32.totalorder %s289, %s292
      %p301 = scmp.eq.s32.totalorder %s36, 2
      %p302 = por %p300, %p301
      %p303 = scmp.ne.s32.totalorder %s292, %s293
      %p304 = scmp.eq.s32.totalorder %s36, 0
      %p305 = por %p303, %p304
      %p306 = scmp.ne.s32.totalorder %s292, %s293
      %p307 = scmp.eq.s32.totalorder %s37, 2
      %p308 = por %p306, %p307
      %p310 = scmp.ne.s32.totalorder %s293, %s309
      %p311 = scmp.eq.s32.totalorder %s37, 0
      %p312 = por %p310, %p311
      %s313 = ssub.s32 %s38, %s50
      %p314 = scmp.eq.s32.totalorder %s313, 0
      %s316 = sadd.s32 %s315, 1
      %s317 = scalar_select %p314, %s315, %s316
      %p320 = pneg %p314
      %p321 = scmp.eq.s32.totalorder %s31, 2
      %p322 = por %p320, %p321
      %p323 = scmp.ne.s32.totalorder %s315, %s318
      %p324 = scmp.eq.s32.totalorder %s31, 0
      %p325 = por %p323, %p324
      %p326 = scmp.ne.s32.totalorder %s315, %s318
      %p327 = scmp.eq.s32.totalorder %s36, 2
      %p328 = por %p326, %p327
      %p329 = scmp.ne.s32.totalorder %s318, %s319
      %p330 = scmp.eq.s32.totalorder %s36, 0
      %p331 = por %p329, %p330
      %p332 = scmp.ne.s32.totalorder %s318, %s319
      %p333 = scmp.eq.s32.totalorder %s37, 2
      %p334 = por %p332, %p333
      %p336 = scmp.ne.s32.totalorder %s319, %s335
      %p337 = scmp.eq.s32.totalorder %s37, 0
      %p338 = por %p336, %p337
      %s339 = ssub.s32 %s38, %s50
      %s340 = ssub.s32 %s39, %s46
      %s341 = sor.u32 %s339, %s340
      %p342 = scmp.eq.s32.totalorder %s341, 0
      %s344 = sadd.s32 %s343, 1
      %s345 = scalar_select %p342, %s343, %s344
      %p348 = pneg %p342
      %p349 = scmp.eq.s32.totalorder %s31, 2
      %p350 = por %p348, %p349
      %p351 = scmp.ne.s32.totalorder %s343, %s346
      %p352 = scmp.eq.s32.totalorder %s31, 0
      %p353 = por %p351, %p352
      %p354 = scmp.ne.s32.totalorder %s343, %s346
      %p355 = scmp.eq.s32.totalorder %s36, 2
      %p356 = por %p354, %p355
      %p357 = scmp.ne.s32.totalorder %s346, %s347
      %p358 = scmp.eq.s32.totalorder %s36, 0
      %p359 = por %p357, %p358
      %p360 = scmp.ne.s32.totalorder %s346, %s347
      %p361 = scmp.eq.s32.totalorder %s37, 2
      %p362 = por %p360, %p361
      %p364 = scmp.ne.s32.totalorder %s347, %s363
      %p365 = scmp.eq.s32.totalorder %s37, 0
      %p366 = por %p364, %p365
      %p367 = scmp.le.s32.totalorder 1, %s31
      %p368 = scmp.lt.s32.totalorder %s31, 4
      %p369 = pnand %p367, %p368
      %p370 = pneg %p369
      // Predicated region
      $region9: #{tpu_custom_call.1} parent=5 // pred_check
        _
      $region10: #{tpu_custom_call.1} parent=5 // pred_check_branch
        %372 = sbr.rel (%p369) target = $region12
      $region11: #{tpu_custom_call.1} parent=5 // pred_region
        %s373 = ssub.s32 %s31, 1
      $region12: #{tpu_custom_call.1} parent=5 // pred_fallthru
        _
      %p374 = scmp.lt.s32.totalorder %s31, 3
      // Predicated region
      $region13: #{tpu_custom_call.1} parent=5 // pred_check
        %p375 = pneg %p374
      $region14: #{tpu_custom_call.1} parent=5 // pred_check_branch
        %377 = sbr.rel (%p375) target = $region16
      $region15: #{tpu_custom_call.1} parent=5 // pred_region
        // Predicated region
        $region17: #{tpu_custom_call.1} parent=15 // pred_check
          %p378 = pneg %p65
        $region18: #{tpu_custom_call.1} parent=15 // pred_check_branch
          %380 = sbr.rel (%p378) target = $region20
        $region19: #{tpu_custom_call.1} parent=15 // pred_region
          %s381 = sand.u32 %s55, 1
          %s382 = scalar_lea.sflag [#allocation5], %s381
          %s383 = sand.u32 %s55, 1
          %s384 = smul.addr %s383, 8
          %s385 = scalar_lea.vmem [#allocation4], %s384
          %s387 = ssub.s32 128, 128
          %388 = vsyncadd %s382, %s387
          %s389 = sadd.s32 %s39, %s38
          %s390 = smul.addr %s389, 128
          %s391 = scalar_lea.hbm %s1, %s390
          %s393 = sshll.u32 %s385, 4
          %s394 = int_to_ptr.vmem [resolvable:$true] %s393
          %396 = dma.hbm_to_vmem [thread:$0]  %s391, 128, %s394, %s382
        $region20: #{tpu_custom_call.1} parent=15 // pred_fallthru
          _
        // Predicated region
        $region21: #{tpu_custom_call.1} parent=15 // pred_check
          %p397 = pneg %p91
        $region22: #{tpu_custom_call.1} parent=15 // pred_check_branch
          %399 = sbr.rel (%p397) target = $region24
        $region23: #{tpu_custom_call.1} parent=15 // pred_region
          %p400 = scmp.lt.s32.totalorder %s38, 2
          %s401 = scalar_select %p400, %s38, 2
          %s402 = smul.addr %s401, 16
          %s403 = smul.addr %s402, 8
          %s404 = scalar_lea.vmem %s2, %s403
        $region24: #{tpu_custom_call.1} parent=15 // pred_fallthru
          _
        // Predicated region
        $region25: #{tpu_custom_call.1} parent=15 // pred_check
          %p405 = pneg %p117
        $region26: #{tpu_custom_call.1} parent=15 // pred_check_branch
          %407 = sbr.rel (%p405) target = $region28
        $region27: #{tpu_custom_call.1} parent=15 // pred_region
          %s408 = sand.u32 %s31, 1
          %s409 = scalar_lea.sflag [#allocation8], %s408
          %s410 = sand.u32 %s107, 1
          %s411 = scalar_lea.vmem [#allocation7], %s410
          %s413 = ssub.s32 16, 16
          %414 = vsyncadd %s409, %s413
          %s415 = smul.addr %s38, 16
          %s416 = scalar_lea.hbm %s3, %s415
          %s418 = sshll.u32 %s411, 4
          %s419 = int_to_ptr.vmem [resolvable:$true] %s418
          %421 = dma.hbm_to_vmem [thread:$0]  %s416, 16, %s419, %s409
        $region28: #{tpu_custom_call.1} parent=15 // pred_fallthru
          _
        // Predicated region
        $region29: #{tpu_custom_call.1} parent=15 // pred_check
          %p422 = pneg %p143
        $region30: #{tpu_custom_call.1} parent=15 // pred_check_branch
          %424 = sbr.rel (%p422) target = $region32
        $region31: #{tpu_custom_call.1} parent=15 // pred_region
          %p425 = scmp.lt.s32.totalorder %s38, 2
          %s426 = scalar_select %p425, %s38, 2
          %s427 = smul.addr %s426, 8
          %s428 = smul.addr %s427, 8
          %s429 = scalar_lea.vmem %s4, %s428
        $region32: #{tpu_custom_call.1} parent=15 // pred_fallthru
          _
        // Predicated region
        $region33: #{tpu_custom_call.1} parent=15 // pred_check
          %p430 = pneg %p169
        $region34: #{tpu_custom_call.1} parent=15 // pred_check_branch
          %432 = sbr.rel (%p430) target = $region36
        $region35: #{tpu_custom_call.1} parent=15 // pred_region
          %p433 = scmp.lt.s32.totalorder %s38, 2
          %s434 = scalar_select %p433, %s38, 2
          %s435 = scalar_lea.vmem %s5, %s434
        $region36: #{tpu_custom_call.1} parent=15 // pred_fallthru
          _
        // Predicated region
        $region37: #{tpu_custom_call.1} parent=15 // pred_check
          %p436 = pneg %p195
        $region38: #{tpu_custom_call.1} parent=15 // pred_check_branch
          %438 = sbr.rel (%p436) target = $region40
        $region39: #{tpu_custom_call.1} parent=15 // pred_region
          %p439 = scmp.lt.s32.totalorder %s38, 2
          %s440 = scalar_select %p439, %s38, 2
          %s441 = smul.addr %s440, 8
          %s442 = smul.addr %s441, 8
          %s443 = scalar_lea.vmem %s6, %s442
        $region40: #{tpu_custom_call.1} parent=15 // pred_fallthru
          _
        // Predicated region
        $region41: #{tpu_custom_call.1} parent=15 // pred_check
          %p444 = pneg %p221
        $region42: #{tpu_custom_call.1} parent=15 // pred_check_branch
          %446 = sbr.rel (%p444) target = $region44
        $region43: #{tpu_custom_call.1} parent=15 // pred_region
          %p447 = scmp.lt.s32.totalorder %s38, 2
          %s448 = scalar_select %p447, %s38, 2
          %s449 = scalar_lea.vmem %s7, %s448
        $region44: #{tpu_custom_call.1} parent=15 // pred_fallthru
          _
        // Predicated region
        $region45: #{tpu_custom_call.1} parent=15 // pred_check
          %p450 = pneg %p247
        $region46: #{tpu_custom_call.1} parent=15 // pred_check_branch
          %452 = sbr.rel (%p450) target = $region48
        $region47: #{tpu_custom_call.1} parent=15 // pred_region
          %p453 = scmp.lt.s32.totalorder %s38, 2
          %s454 = scalar_select %p453, %s38, 2
          %s455 = smul.addr %s454, 8
          %s456 = smul.addr %s455, 8
          %s457 = scalar_lea.vmem %s8, %s456
        $region48: #{tpu_custom_call.1} parent=15 // pred_fallthru
          _
        // Predicated region
        $region49: #{tpu_custom_call.1} parent=15 // pred_check
          %p458 = pneg %p273
        $region50: #{tpu_custom_call.1} parent=15 // pred_check_branch
          %460 = sbr.rel (%p458) target = $region52
        $region51: #{tpu_custom_call.1} parent=15 // pred_region
          %p461 = scmp.lt.s32.totalorder %s38, 2
          %s462 = scalar_select %p461, %s38, 2
          %s463 = scalar_lea.vmem %s9, %s462
        $region52: #{tpu_custom_call.1} parent=15 // pred_fallthru
          _
        // Predicated region
        $region53: #{tpu_custom_call.1} parent=15 // pred_check
          %p464 = pneg %p299
        $region54: #{tpu_custom_call.1} parent=15 // pred_check_branch
          %466 = sbr.rel (%p464) target = $region56
        $region55: #{tpu_custom_call.1} parent=15 // pred_region
          %s467 = sand.u32 %s31, 1
          %s468 = scalar_lea.sflag [#allocation8], %s467
          %s469 = sand.u32 %s289, 1
          %s470 = smul.addr %s469, 64
          %s471 = scalar_lea.vmem [#allocation9], %s470
          %s473 = ssub.s32 1024, 1024
          %474 = vsyncadd %s468, %s473
          %s475 = smul.addr %s38, 8
          %s476 = smul.addr %s475, 128
          %s477 = scalar_lea.hbm %s10, %s476
          %s478 = sshll.u32 %s471, 4
          %s479 = int_to_ptr.vmem [resolvable:$true] %s478
          %484 = dma.hbm_to_vmem [thread:$0]  %s477, 1024, %s479, %s468, 128, 128, 8
        $region56: #{tpu_custom_call.1} parent=15 // pred_fallthru
          _
        // Predicated region
        $region57: #{tpu_custom_call.1} parent=15 // pred_check
          %p485 = pneg %p325
        $region58: #{tpu_custom_call.1} parent=15 // pred_check_branch
          %487 = sbr.rel (%p485) target = $region60
        $region59: #{tpu_custom_call.1} parent=15 // pred_region
          %p488 = scmp.lt.s32.totalorder %s38, 2
          %s489 = scalar_select %p488, %s38, 2
          %s490 = scalar_lea.vmem %s11, %s489
        $region60: #{tpu_custom_call.1} parent=15 // pred_fallthru
          _
      $region16: #{tpu_custom_call.1} parent=5 // pred_fallthru
        _
      %p491 = scmp.le.s32.totalorder 1, %s31
      %p492 = scmp.lt.s32.totalorder %s31, 4
      %p493 = pnand %p491, %p492
      %p494 = pneg %p493
      // Predicated region
      $region61: #{tpu_custom_call.1} parent=5 // pred_check
        _
      $region62: #{tpu_custom_call.1} parent=5 // pred_check_branch
        %496 = sbr.rel (%p493) target = $region64
      $region63: #{tpu_custom_call.1} parent=5 // pred_region
        %s497 = ssub.s32 %s31, 1
        %s498 = sand.u32 %s58, 1
        %s499 = scalar_lea.sflag [#allocation5], %s498
        %s500 = sand.u32 %s58, 1
        %s501 = smul.addr %s500, 8
        %s502 = scalar_lea.vmem [#allocation4], %s501
        // Predicated region
        $region65: #{tpu_custom_call.1} parent=63 // pred_check
          %p503 = pneg %p71
        $region66: #{tpu_custom_call.1} parent=63 // pred_check_branch
          %505 = sbr.rel (%p503) target = $region68
        $region67: #{tpu_custom_call.1} parent=63 // pred_region
          %506 = dma.done %s499, 128
        $region68: #{tpu_custom_call.1} parent=63 // pred_fallthru
          _
        %s507 = sand.u32 %s36, 1
        %s508 = scalar_lea.sflag [#allocation8], %s507
        %s509 = sand.u32 %s110, 1
        %s510 = scalar_lea.vmem [#allocation7], %s509
        // Predicated region
        $region69: #{tpu_custom_call.1} parent=63 // pred_check
          %p511 = pneg %p123
        $region70: #{tpu_custom_call.1} parent=63 // pred_check_branch
          %513 = sbr.rel (%p511) target = $region72
        $region71: #{tpu_custom_call.1} parent=63 // pred_region
          %514 = dma.done %s508, 16
        $region72: #{tpu_custom_call.1} parent=63 // pred_fallthru
          _
        %s515 = sand.u32 %s36, 1
        %s516 = scalar_lea.sflag [#allocation8], %s515
        %s517 = sand.u32 %s292, 1
        %s518 = smul.addr %s517, 64
        %s519 = scalar_lea.vmem [#allocation9], %s518
        // Predicated region
        $region73: #{tpu_custom_call.1} parent=63 // pred_check
          %p520 = pneg %p305
        $region74: #{tpu_custom_call.1} parent=63 // pred_check_branch
          %522 = sbr.rel (%p520) target = $region76
        $region75: #{tpu_custom_call.1} parent=63 // pred_region
          %523 = dma.done %s516, 1024
        $region76: #{tpu_custom_call.1} parent=63 // pred_fallthru
          _
        %s524 = sand.u32 %s58, 1
        %s525 = scalar_lea.sflag [#allocation5], %s524
        %s526 = sand.u32 %s58, 1
        %s527 = smul.addr %s526, 8
        %s528 = scalar_lea.vmem [#allocation4], %s527
        %p529 = pneg %p71
        %p530 = pneg %p68
        %p531 = scmp.lt.s32.totalorder %s40, 2
        %s532 = scalar_select %p531, %s40, 2
        %s533 = smul.addr %s532, 16
        %s534 = smul.addr %s533, 8
        %s535 = scalar_lea.vmem %s2, %s534
        %p536 = pneg %p97
        %p537 = pneg %p94
        %s538 = sand.u32 %s36, 1
        %s539 = scalar_lea.sflag [#allocation8], %s538
        %s540 = sand.u32 %s110, 1
        %s541 = scalar_lea.vmem [#allocation7], %s540
        %p542 = pneg %p123
        %p543 = pneg %p120
        %p544 = scmp.lt.s32.totalorder %s40, 2
        %s545 = scalar_select %p544, %s40, 2
        %s546 = smul.addr %s545, 8
        %s547 = smul.addr %s546, 8
        %s548 = scalar_lea.vmem %s4, %s547
        %p549 = pneg %p149
        %p550 = pneg %p146
        %p551 = scmp.lt.s32.totalorder %s40, 2
        %s552 = scalar_select %p551, %s40, 2
        %s553 = scalar_lea.vmem %s5, %s552
        %p554 = pneg %p175
        %p555 = pneg %p172
        %p556 = scmp.lt.s32.totalorder %s40, 2
        %s557 = scalar_select %p556, %s40, 2
        %s558 = smul.addr %s557, 8
        %s559 = smul.addr %s558, 8
        %s560 = scalar_lea.vmem %s6, %s559
        %p561 = pneg %p201
        %p562 = pneg %p198
        %p563 = scmp.lt.s32.totalorder %s40, 2
        %s564 = scalar_select %p563, %s40, 2
        %s565 = scalar_lea.vmem %s7, %s564
        %p566 = pneg %p227
        %p567 = pneg %p224
        %p568 = scmp.lt.s32.totalorder %s40, 2
        %s569 = scalar_select %p568, %s40, 2
        %s570 = smul.addr %s569, 8
        %s571 = smul.addr %s570, 8
        %s572 = scalar_lea.vmem %s8, %s571
        %p573 = pneg %p253
        %p574 = pneg %p250
        %p575 = scmp.lt.s32.totalorder %s40, 2
        %s576 = scalar_select %p575, %s40, 2
        %s577 = scalar_lea.vmem %s9, %s576
        %p578 = pneg %p279
        %p579 = pneg %p276
        %s580 = sand.u32 %s36, 1
        %s581 = scalar_lea.sflag [#allocation8], %s580
        %s582 = sand.u32 %s292, 1
        %s583 = smul.addr %s582, 64
        %s584 = scalar_lea.vmem [#allocation9], %s583
        %p585 = pneg %p305
        %p586 = pneg %p302
        %p587 = scmp.lt.s32.totalorder %s40, 2
        %s588 = scalar_select %p587, %s40, 2
        %s589 = scalar_lea.vmem %s11, %s588
        %p590 = pneg %p331
        %p591 = pneg %p328
        %p592 = pneg %p359
        %p593 = pneg %p356
        %s594 = sand.u32 %s346, 1
        %s595 = scalar_lea.sflag [#allocation6], %s594
        %s596 = sand.u32 %s346, 1
        %s597 = smul.addr %s596, 8
        %s598 = scalar_lea.vmem [#allocation10], %s597
        %p599 = scmp.lt.s32.totalorder %s40, 2
        %s600 = scalar_select %p599, %s40, 2
        %s601 = smul.addr %s600, 16
        %s602 = smul.addr %s601, 8
        %s603 = scalar_lea.vmem %s2, %s602
        %p604 = scmp.lt.s32.totalorder %s40, 2
        %s605 = scalar_select %p604, %s40, 2
        %s606 = smul.addr %s605, 8
        %s607 = smul.addr %s606, 8
        %s608 = scalar_lea.vmem %s4, %s607
        %p609 = scmp.lt.s32.totalorder %s40, 2
        %s610 = scalar_select %p609, %s40, 2
        %s611 = scalar_lea.vmem %s5, %s610
        %p612 = scmp.lt.s32.totalorder %s40, 2
        %s613 = scalar_select %p612, %s40, 2
        %s614 = smul.addr %s613, 8
        %s615 = smul.addr %s614, 8
        %s616 = scalar_lea.vmem %s6, %s615
        %p617 = scmp.lt.s32.totalorder %s40, 2
        %s618 = scalar_select %p617, %s40, 2
        %s619 = scalar_lea.vmem %s7, %s618
        %p620 = scmp.lt.s32.totalorder %s40, 2
        %s621 = scalar_select %p620, %s40, 2
        %s622 = smul.addr %s621, 8
        %s623 = smul.addr %s622, 8
        %s624 = scalar_lea.vmem %s8, %s623
        %p625 = scmp.lt.s32.totalorder %s40, 2
        %s626 = scalar_select %p625, %s40, 2
        %s627 = scalar_lea.vmem %s9, %s626
        %p628 = scmp.lt.s32.totalorder %s40, 2
        %s629 = scalar_select %p628, %s40, 2
        %s630 = scalar_lea.vmem %s11, %s629
        %s631 = smul.u32 %s41, 8
        %s632 = sld [smem:[#allocation3 + %s40]]
        %p633 = scmp.lt.s32.totalorder %s631, %s632
        // Predicated region
        $region77: #{tpu_custom_call.1} parent=63 // pred_check
          %p634 = pneg %p633
        $region78: #{tpu_custom_call.1} parent=63 // pred_check_branch
          %636 = sbr.rel (%p634) target = $region80
        $region79: #{tpu_custom_call.1} parent=63 // pred_region
          %v637 = vld [vmem:[%s502] sm:$0xff]
          %v638 = vld [vmem:[%s603] sm:$0xff]
          %v639 = vld [vmem:[%s603 + $0x8] sm:$0xff]
          %v640 = vld [vmem:[%s603 + $0x10] sm:$0xff]
          %v641 = vld [vmem:[%s603 + $0x18] sm:$0xff]
          %v642 = vld [vmem:[%s603 + $0x20] sm:$0xff]
          %v643 = vld [vmem:[%s603 + $0x28] sm:$0xff]
          %v644 = vld [vmem:[%s603 + $0x30] sm:$0xff]
          %v645 = vld [vmem:[%s603 + $0x38] sm:$0xff]
          %v646 = vld [vmem:[%s603 + $0x40] sm:$0xff]
          %v647 = vld [vmem:[%s603 + $0x48] sm:$0xff]
          %v648 = vld [vmem:[%s603 + $0x50] sm:$0xff]
          %v649 = vld [vmem:[%s603 + $0x58] sm:$0xff]
          %v650 = vld [vmem:[%s603 + $0x60] sm:$0xff]
          %v651 = vld [vmem:[%s603 + $0x68] sm:$0xff]
          %v652 = vld [vmem:[%s603 + $0x70] sm:$0xff]
          %v653 = vld [vmem:[%s603 + $0x78] sm:$0xff]
          %v654 = vld [vmem:[%s510] sm:$0x1]
          %v656 = vlaneseq
          %v657 = vshrl.u32 %v656, 7
          %v658 = vsub.s32 0, %v657
          %v659 = vrot.slane %v654, %v658
          %661 = vmatprep.subr.mxu0 0.0
          %662 = vmatpush1.msra.mxu0 %v653
          %663 = vmatprep.subr.mxu0 0.0
          %664 = vmatpush1.msra.mxu0 %v652
          %665 = vmatprep.subr.mxu0 0.0
          %666 = vmatpush1.msra.mxu0 %v651
          %667 = vmatprep.subr.mxu0 0.0
          %668 = vmatpush1.msra.mxu0 %v650
          %669 = vmatprep.subr.mxu0 0.0
          %670 = vmatpush1.msra.mxu0 %v649
          %671 = vmatprep.subr.mxu0 0.0
          %672 = vmatpush1.msra.mxu0 %v648
          %673 = vmatprep.subr.mxu0 0.0
          %674 = vmatpush1.msra.mxu0 %v647
          %675 = vmatprep.subr.mxu0 0.0
          %676 = vmatpush1.msra.mxu0 %v646
          %677 = vmatprep.subr.mxu0 0.0
          %678 = vmatpush1.msra.mxu0 %v645
          %679 = vmatprep.subr.mxu0 0.0
          %680 = vmatpush1.msra.mxu0 %v644
          %681 = vmatprep.subr.mxu0 0.0
          %682 = vmatpush1.msra.mxu0 %v643
          %683 = vmatprep.subr.mxu0 0.0
          %684 = vmatpush1.msra.mxu0 %v642
          %685 = vmatprep.subr.mxu0 0.0
          %686 = vmatpush1.msra.mxu0 %v641
          %687 = vmatprep.subr.mxu0 0.0
          %688 = vmatpush1.msra.mxu0 %v640
          %689 = vmatprep.subr.mxu0 0.0
          %690 = vmatpush1.msra.mxu0 %v639
          %691 = vmatprep.subr.mxu0 0.0
          %692 = vmatpush1.msra.mxu0 %v638
          %693 = vmatprep.subr.mxu0 0.0
          %694 = vmatpush2.msra.mxu0 0.0
          %695 = vmatprep.subr.mxu0 0.0
          %696 = vmatpush2.msra.mxu0 0.0
          %697 = vmatprep.subr.mxu0 0.0
          %698 = vmatpush2.msra.mxu0 0.0
          %699 = vmatprep.subr.mxu0 0.0
          %700 = vmatpush2.msra.mxu0 0.0
          %701 = vmatprep.subr.mxu0 0.0
          %702 = vmatpush2.msra.mxu0 0.0
          %703 = vmatprep.subr.mxu0 0.0
          %704 = vmatpush2.msra.mxu0 0.0
          %705 = vmatprep.subr.mxu0 0.0
          %706 = vmatpush2.msra.mxu0 0.0
          %707 = vmatprep.subr.mxu0 0.0
          %708 = vmatpush2.msra.mxu0 0.0
          %709 = vmatprep.subr.mxu0 0.0
          %710 = vmatpush2.msra.mxu0 0.0
          %711 = vmatprep.subr.mxu0 0.0
          %712 = vmatpush2.msra.mxu0 0.0
          %713 = vmatprep.subr.mxu0 0.0
          %714 = vmatpush2.msra.mxu0 0.0
          %715 = vmatprep.subr.mxu0 0.0
          %716 = vmatpush2.msra.mxu0 0.0
          %717 = vmatprep.subr.mxu0 0.0
          %718 = vmatpush2.msra.mxu0 0.0
          %719 = vmatprep.subr.mxu0 0.0
          %720 = vmatpush2.msra.mxu0 0.0
          %721 = vmatprep.subr.mxu0 0.0
          %722 = vmatpush2.msra.mxu0 0.0
          %723 = vmatprep.subr.mxu0 0.0
          %724 = vmatpush2.msra.mxu0 0.0
          %725 = vmatprep.mubr.f32.mxu0 0.0
          %726 = vmatmul.mubr.f32.gmra.mxu0 %v637
          %v727 = vpop.f32.mrf.mxu0
          %v728 = vadd.f32 %v659, %v727
          %v729 = vpop.f32.mrf.mxu0
          %730 = vdwg.mxu0
          %v731 = vtanh.pop %v728
          %v732 = vld [vmem:[%s608] sm:$0xff]
          %v733 = vld [vmem:[%s608 + $0x8] sm:$0xff]
          %v734 = vld [vmem:[%s608 + $0x10] sm:$0xff]
          %v735 = vld [vmem:[%s608 + $0x18] sm:$0xff]
          %v736 = vld [vmem:[%s608 + $0x20] sm:$0xff]
          %v737 = vld [vmem:[%s608 + $0x28] sm:$0xff]
          %v738 = vld [vmem:[%s608 + $0x30] sm:$0xff]
          %v739 = vld [vmem:[%s608 + $0x38] sm:$0xff]
          %v740 = vld [vmem:[%s611] sm:$0x1]
          %v742 = vlaneseq
          %v743 = vshrl.u32 %v742, 7
          %v744 = vsub.s32 0, %v743
          %v745 = vrot.slane %v740, %v744
          %vm747 = vcmask 523264
          %v749 = vsel %vm747, %v731, 0
          %751 = vmatprep.subr.mxu0 0.0
          %752 = vmatpush1.msra.mxu0 0.0
          %753 = vmatprep.subr.mxu0 0.0
          %754 = vmatpush1.msra.mxu0 0.0
          %755 = vmatprep.subr.mxu0 0.0
          %756 = vmatpush1.msra.mxu0 0.0
          %757 = vmatprep.subr.mxu0 0.0
          %758 = vmatpush1.msra.mxu0 0.0
          %759 = vmatprep.subr.mxu0 0.0
          %760 = vmatpush1.msra.mxu0 0.0
          %761 = vmatprep.subr.mxu0 0.0
          %762 = vmatpush1.msra.mxu0 0.0
          %763 = vmatprep.subr.mxu0 0.0
          %764 = vmatpush1.msra.mxu0 0.0
          %765 = vmatprep.subr.mxu0 0.0
          %766 = vmatpush1.msra.mxu0 0.0
          %767 = vmatprep.subr.mxu0 0.0
          %768 = vmatpush1.msra.mxu0 %v739
          %769 = vmatprep.subr.mxu0 0.0
          %770 = vmatpush1.msra.mxu0 %v738
          %771 = vmatprep.subr.mxu0 0.0
          %772 = vmatpush1.msra.mxu0 %v737
          %773 = vmatprep.subr.mxu0 0.0
          %774 = vmatpush1.msra.mxu0 %v736
          %775 = vmatprep.subr.mxu0 0.0
          %776 = vmatpush1.msra.mxu0 %v735
          %777 = vmatprep.subr.mxu0 0.0
          %778 = vmatpush1.msra.mxu0 %v734
          %779 = vmatprep.subr.mxu0 0.0
          %780 = vmatpush1.msra.mxu0 %v733
          %781 = vmatprep.subr.mxu0 0.0
          %782 = vmatpush1.msra.mxu0 %v732
          %783 = vmatprep.subr.mxu0 0.0
          %784 = vmatpush2.msra.mxu0 0.0
          %785 = vmatprep.subr.mxu0 0.0
          %786 = vmatpush2.msra.mxu0 0.0
          %787 = vmatprep.subr.mxu0 0.0
          %788 = vmatpush2.msra.mxu0 0.0
          %789 = vmatprep.subr.mxu0 0.0
          %790 = vmatpush2.msra.mxu0 0.0
          %791 = vmatprep.subr.mxu0 0.0
          %792 = vmatpush2.msra.mxu0 0.0
          %793 = vmatprep.subr.mxu0 0.0
          %794 = vmatpush2.msra.mxu0 0.0
          %795 = vmatprep.subr.mxu0 0.0
          %796 = vmatpush2.msra.mxu0 0.0
          %797 = vmatprep.subr.mxu0 0.0
          %798 = vmatpush2.msra.mxu0 0.0
          %799 = vmatprep.subr.mxu0 0.0
          %800 = vmatpush2.msra.mxu0 0.0
          %801 = vmatprep.subr.mxu0 0.0
          %802 = vmatpush2.msra.mxu0 0.0
          %803 = vmatprep.subr.mxu0 0.0
          %804 = vmatpush2.msra.mxu0 0.0
          %805 = vmatprep.subr.mxu0 0.0
          %806 = vmatpush2.msra.mxu0 0.0
          %807 = vmatprep.subr.mxu0 0.0
          %808 = vmatpush2.msra.mxu0 0.0
          %809 = vmatprep.subr.mxu0 0.0
          %810 = vmatpush2.msra.mxu0 0.0
          %811 = vmatprep.subr.mxu0 0.0
          %812 = vmatpush2.msra.mxu0 0.0
          %813 = vmatprep.subr.mxu0 0.0
          %814 = vmatpush2.msra.mxu0 0.0
          %815 = vmatprep.mubr.f32.mxu0 0.0
          %816 = vmatmul.mubr.f32.gmra.mxu0 %v749
          %v817 = vpop.f32.mrf.mxu0
          %v818 = vadd.f32 %v745, %v817
          %v819 = vpop.f32.mrf.mxu0
          %820 = vdwg.mxu0
          %v821 = vtanh.pop %v818
          %v822 = vld [vmem:[%s616] sm:$0xff]
          %v823 = vld [vmem:[%s616 + $0x8] sm:$0xff]
          %v824 = vld [vmem:[%s616 + $0x10] sm:$0xff]
          %v825 = vld [vmem:[%s616 + $0x18] sm:$0xff]
          %v826 = vld [vmem:[%s616 + $0x20] sm:$0xff]
          %v827 = vld [vmem:[%s616 + $0x28] sm:$0xff]
          %v828 = vld [vmem:[%s616 + $0x30] sm:$0xff]
          %v829 = vld [vmem:[%s616 + $0x38] sm:$0xff]
          %v830 = vld [vmem:[%s619] sm:$0x1]
          %v832 = vlaneseq
          %v833 = vshrl.u32 %v832, 7
          %v834 = vsub.s32 0, %v833
          %v835 = vrot.slane %v830, %v834
          %v838 = vsel %vm747, %v821, 0
          %840 = vmatprep.subr.mxu0 0.0
          %841 = vmatpush1.msra.mxu0 0.0
          %842 = vmatprep.subr.mxu0 0.0
          %843 = vmatpush1.msra.mxu0 0.0
          %844 = vmatprep.subr.mxu0 0.0
          %845 = vmatpush1.msra.mxu0 0.0
          %846 = vmatprep.subr.mxu0 0.0
          %847 = vmatpush1.msra.mxu0 0.0
          %848 = vmatprep.subr.mxu0 0.0
          %849 = vmatpush1.msra.mxu0 0.0
          %850 = vmatprep.subr.mxu0 0.0
          %851 = vmatpush1.msra.mxu0 0.0
          %852 = vmatprep.subr.mxu0 0.0
          %853 = vmatpush1.msra.mxu0 0.0
          %854 = vmatprep.subr.mxu0 0.0
          %855 = vmatpush1.msra.mxu0 0.0
          %856 = vmatprep.subr.mxu0 0.0
          %857 = vmatpush1.msra.mxu0 %v829
          %858 = vmatprep.subr.mxu0 0.0
          %859 = vmatpush1.msra.mxu0 %v828
          %860 = vmatprep.subr.mxu0 0.0
          %861 = vmatpush1.msra.mxu0 %v827
          %862 = vmatprep.subr.mxu0 0.0
          %863 = vmatpush1.msra.mxu0 %v826
          %864 = vmatprep.subr.mxu0 0.0
          %865 = vmatpush1.msra.mxu0 %v825
          %866 = vmatprep.subr.mxu0 0.0
          %867 = vmatpush1.msra.mxu0 %v824
          %868 = vmatprep.subr.mxu0 0.0
          %869 = vmatpush1.msra.mxu0 %v823
          %870 = vmatprep.subr.mxu0 0.0
          %871 = vmatpush1.msra.mxu0 %v822
          %872 = vmatprep.subr.mxu0 0.0
          %873 = vmatpush2.msra.mxu0 0.0
          %874 = vmatprep.subr.mxu0 0.0
          %875 = vmatpush2.msra.mxu0 0.0
          %876 = vmatprep.subr.mxu0 0.0
          %877 = vmatpush2.msra.mxu0 0.0
          %878 = vmatprep.subr.mxu0 0.0
          %879 = vmatpush2.msra.mxu0 0.0
          %880 = vmatprep.subr.mxu0 0.0
          %881 = vmatpush2.msra.mxu0 0.0
          %882 = vmatprep.subr.mxu0 0.0
          %883 = vmatpush2.msra.mxu0 0.0
          %884 = vmatprep.subr.mxu0 0.0
          %885 = vmatpush2.msra.mxu0 0.0
          %886 = vmatprep.subr.mxu0 0.0
          %887 = vmatpush2.msra.mxu0 0.0
          %888 = vmatprep.subr.mxu0 0.0
          %889 = vmatpush2.msra.mxu0 0.0
          %890 = vmatprep.subr.mxu0 0.0
          %891 = vmatpush2.msra.mxu0 0.0
          %892 = vmatprep.subr.mxu0 0.0
          %893 = vmatpush2.msra.mxu0 0.0
          %894 = vmatprep.subr.mxu0 0.0
          %895 = vmatpush2.msra.mxu0 0.0
          %896 = vmatprep.subr.mxu0 0.0
          %897 = vmatpush2.msra.mxu0 0.0
          %898 = vmatprep.subr.mxu0 0.0
          %899 = vmatpush2.msra.mxu0 0.0
          %900 = vmatprep.subr.mxu0 0.0
          %901 = vmatpush2.msra.mxu0 0.0
          %902 = vmatprep.subr.mxu0 0.0
          %903 = vmatpush2.msra.mxu0 0.0
          %904 = vmatprep.mubr.f32.mxu0 0.0
          %905 = vmatmul.mubr.f32.gmra.mxu0 %v838
          %v906 = vpop.f32.mrf.mxu0
          %v907 = vadd.f32 %v835, %v906
          %v908 = vpop.f32.mrf.mxu0
          %909 = vdwg.mxu0
          %v910 = vtanh.pop %v907
          %v911 = vld [vmem:[%s624] sm:$0xff]
          %v912 = vld [vmem:[%s624 + $0x8] sm:$0xff]
          %v913 = vld [vmem:[%s624 + $0x10] sm:$0xff]
          %v914 = vld [vmem:[%s624 + $0x18] sm:$0xff]
          %v915 = vld [vmem:[%s624 + $0x20] sm:$0xff]
          %v916 = vld [vmem:[%s624 + $0x28] sm:$0xff]
          %v917 = vld [vmem:[%s624 + $0x30] sm:$0xff]
          %v918 = vld [vmem:[%s624 + $0x38] sm:$0xff]
          %v919 = vld [vmem:[%s627] sm:$0x1]
          %v921 = vlaneseq
          %v922 = vshrl.u32 %v921, 7
          %v923 = vsub.s32 0, %v922
          %v924 = vrot.slane %v919, %v923
          %v927 = vsel %vm747, %v910, 0
          %929 = vmatprep.subr.mxu0 0.0
          %930 = vmatpush1.msra.mxu0 0.0
          %931 = vmatprep.subr.mxu0 0.0
          %932 = vmatpush1.msra.mxu0 0.0
          %933 = vmatprep.subr.mxu0 0.0
          %934 = vmatpush1.msra.mxu0 0.0
          %935 = vmatprep.subr.mxu0 0.0
          %936 = vmatpush1.msra.mxu0 0.0
          %937 = vmatprep.subr.mxu0 0.0
          %938 = vmatpush1.msra.mxu0 0.0
          %939 = vmatprep.subr.mxu0 0.0
          %940 = vmatpush1.msra.mxu0 0.0
          %941 = vmatprep.subr.mxu0 0.0
          %942 = vmatpush1.msra.mxu0 0.0
          %943 = vmatprep.subr.mxu0 0.0
          %944 = vmatpush1.msra.mxu0 0.0
          %945 = vmatprep.subr.mxu0 0.0
          %946 = vmatpush1.msra.mxu0 %v918
          %947 = vmatprep.subr.mxu0 0.0
          %948 = vmatpush1.msra.mxu0 %v917
          %949 = vmatprep.subr.mxu0 0.0
          %950 = vmatpush1.msra.mxu0 %v916
          %951 = vmatprep.subr.mxu0 0.0
          %952 = vmatpush1.msra.mxu0 %v915
          %953 = vmatprep.subr.mxu0 0.0
          %954 = vmatpush1.msra.mxu0 %v914
          %955 = vmatprep.subr.mxu0 0.0
          %956 = vmatpush1.msra.mxu0 %v913
          %957 = vmatprep.subr.mxu0 0.0
          %958 = vmatpush1.msra.mxu0 %v912
          %959 = vmatprep.subr.mxu0 0.0
          %960 = vmatpush1.msra.mxu0 %v911
          %961 = vmatprep.subr.mxu0 0.0
          %962 = vmatpush2.msra.mxu0 0.0
          %963 = vmatprep.subr.mxu0 0.0
          %964 = vmatpush2.msra.mxu0 0.0
          %965 = vmatprep.subr.mxu0 0.0
          %966 = vmatpush2.msra.mxu0 0.0
          %967 = vmatprep.subr.mxu0 0.0
          %968 = vmatpush2.msra.mxu0 0.0
          %969 = vmatprep.subr.mxu0 0.0
          %970 = vmatpush2.msra.mxu0 0.0
          %971 = vmatprep.subr.mxu0 0.0
          %972 = vmatpush2.msra.mxu0 0.0
          %973 = vmatprep.subr.mxu0 0.0
          %974 = vmatpush2.msra.mxu0 0.0
          %975 = vmatprep.subr.mxu0 0.0
          %976 = vmatpush2.msra.mxu0 0.0
          %977 = vmatprep.subr.mxu0 0.0
          %978 = vmatpush2.msra.mxu0 0.0
          %979 = vmatprep.subr.mxu0 0.0
          %980 = vmatpush2.msra.mxu0 0.0
          %981 = vmatprep.subr.mxu0 0.0
          %982 = vmatpush2.msra.mxu0 0.0
          %983 = vmatprep.subr.mxu0 0.0
          %984 = vmatpush2.msra.mxu0 0.0
          %985 = vmatprep.subr.mxu0 0.0
          %986 = vmatpush2.msra.mxu0 0.0
          %987 = vmatprep.subr.mxu0 0.0
          %988 = vmatpush2.msra.mxu0 0.0
          %989 = vmatprep.subr.mxu0 0.0
          %990 = vmatpush2.msra.mxu0 0.0
          %991 = vmatprep.subr.mxu0 0.0
          %992 = vmatpush2.msra.mxu0 0.0
          %993 = vmatprep.mubr.f32.mxu0 0.0
          %994 = vmatmul.mubr.f32.gmra.mxu0 %v927
          %v995 = vpop.f32.mrf.mxu0
          %v996 = vadd.f32 %v924, %v995
          %v997 = vpop.f32.mrf.mxu0
          %998 = vdwg.mxu0
          %v999 = vtanh.pop %v996
          %v1000 = vld [vmem:[%s519] sm:$0xff]
          %v1001 = vld [vmem:[%s519 + $0x8] sm:$0xff]
          %v1002 = vld [vmem:[%s519 + $0x10] sm:$0xff]
          %v1003 = vld [vmem:[%s519 + $0x18] sm:$0xff]
          %v1004 = vld [vmem:[%s519 + $0x20] sm:$0xff]
          %v1005 = vld [vmem:[%s519 + $0x28] sm:$0xff]
          %v1006 = vld [vmem:[%s519 + $0x30] sm:$0xff]
          %v1007 = vld [vmem:[%s519 + $0x38] sm:$0xff]
          %v1008 = vld [vmem:[%s630] sm:$0x1]
          %v1010 = vlaneseq
          %v1011 = vshrl.u32 %v1010, 7
          %v1012 = vsub.s32 0, %v1011
          %v1013 = vrot.slane %v1008, %v1012
          %v1016 = vsel %vm747, %v999, 0
          %1018 = vmatprep.subr.mxu0 0.0
          %1019 = vmatpush1.msra.mxu0 0.0
          %1020 = vmatprep.subr.mxu0 0.0
          %1021 = vmatpush1.msra.mxu0 0.0
          %1022 = vmatprep.subr.mxu0 0.0
          %1023 = vmatpush1.msra.mxu0 0.0
          %1024 = vmatprep.subr.mxu0 0.0
          %1025 = vmatpush1.msra.mxu0 0.0
          %1026 = vmatprep.subr.mxu0 0.0
          %1027 = vmatpush1.msra.mxu0 0.0
          %1028 = vmatprep.subr.mxu0 0.0
          %1029 = vmatpush1.msra.mxu0 0.0
          %1030 = vmatprep.subr.mxu0 0.0
          %1031 = vmatpush1.msra.mxu0 0.0
          %1032 = vmatprep.subr.mxu0 0.0
          %1033 = vmatpush1.msra.mxu0 0.0
          %1034 = vmatprep.subr.mxu0 0.0
          %1035 = vmatpush1.msra.mxu0 %v1007
          %1036 = vmatprep.subr.mxu0 0.0
          %1037 = vmatpush1.msra.mxu0 %v1006
          %1038 = vmatprep.subr.mxu0 0.0
          %1039 = vmatpush1.msra.mxu0 %v1005
          %1040 = vmatprep.subr.mxu0 0.0
          %1041 = vmatpush1.msra.mxu0 %v1004
          %1042 = vmatprep.subr.mxu0 0.0
          %1043 = vmatpush1.msra.mxu0 %v1003
          %1044 = vmatprep.subr.mxu0 0.0
          %1045 = vmatpush1.msra.mxu0 %v1002
          %1046 = vmatprep.subr.mxu0 0.0
          %1047 = vmatpush1.msra.mxu0 %v1001
          %1048 = vmatprep.subr.mxu0 0.0
          %1049 = vmatpush1.msra.mxu0 %v1000
          %1050 = vmatprep.subr.mxu0 0.0
          %1051 = vmatpush2.msra.mxu0 0.0
          %1052 = vmatprep.subr.mxu0 0.0
          %1053 = vmatpush2.msra.mxu0 0.0
          %1054 = vmatprep.subr.mxu0 0.0
          %1055 = vmatpush2.msra.mxu0 0.0
          %1056 = vmatprep.subr.mxu0 0.0
          %1057 = vmatpush2.msra.mxu0 0.0
          %1058 = vmatprep.subr.mxu0 0.0
          %1059 = vmatpush2.msra.mxu0 0.0
          %1060 = vmatprep.subr.mxu0 0.0
          %1061 = vmatpush2.msra.mxu0 0.0
          %1062 = vmatprep.subr.mxu0 0.0
          %1063 = vmatpush2.msra.mxu0 0.0
          %1064 = vmatprep.subr.mxu0 0.0
          %1065 = vmatpush2.msra.mxu0 0.0
          %1066 = vmatprep.subr.mxu0 0.0
          %1067 = vmatpush2.msra.mxu0 0.0
          %1068 = vmatprep.subr.mxu0 0.0
          %1069 = vmatpush2.msra.mxu0 0.0
          %1070 = vmatprep.subr.mxu0 0.0
          %1071 = vmatpush2.msra.mxu0 0.0
          %1072 = vmatprep.subr.mxu0 0.0
          %1073 = vmatpush2.msra.mxu0 0.0
          %1074 = vmatprep.subr.mxu0 0.0
          %1075 = vmatpush2.msra.mxu0 0.0
          %1076 = vmatprep.subr.mxu0 0.0
          %1077 = vmatpush2.msra.mxu0 0.0
          %1078 = vmatprep.subr.mxu0 0.0
          %1079 = vmatpush2.msra.mxu0 0.0
          %1080 = vmatprep.subr.mxu0 0.0
          %1081 = vmatpush2.msra.mxu0 0.0
          %1082 = vmatprep.mubr.f32.mxu0 0.0
          %1083 = vmatmul.mubr.f32.gmra.mxu0 %v1016
          %v1084 = vpop.f32.mrf.mxu0
          %v1085 = vadd.f32 %v1013, %v1084
          %v1086 = vpop.f32.mrf.mxu0
          %1087 = vdwg.mxu0
          %1088 = vst [vmem:[%s598] sm:$0xff] %v1085
        $region80: #{tpu_custom_call.1} parent=63 // pred_fallthru
          _
        %p1089 = scmp.ge.s32.totalorder %s631, %s632
        // Predicated region
        $region81: #{tpu_custom_call.1} parent=63 // pred_check
          %p1090 = pneg %p1089
        $region82: #{tpu_custom_call.1} parent=63 // pred_check_branch
          %1092 = sbr.rel (%p1090) target = $region84
        $region83: #{tpu_custom_call.1} parent=63 // pred_region
          %1093 = vst [vmem:[%s598] sm:$0xff] 0.0
        $region84: #{tpu_custom_call.1} parent=63 // pred_fallthru
          _
        %s1094 = sand.u32 %s346, 1
        %s1095 = scalar_lea.sflag [#allocation6], %s1094
        %s1096 = sand.u32 %s346, 1
        %s1097 = smul.addr %s1096, 8
        %s1098 = scalar_lea.vmem [#allocation10], %s1097
        // Predicated region
        $region85: #{tpu_custom_call.1} parent=63 // pred_check
          %p1099 = pneg %p356
        $region86: #{tpu_custom_call.1} parent=63 // pred_check_branch
          %1101 = sbr.rel (%p1099) target = $region88
        $region87: #{tpu_custom_call.1} parent=63 // pred_region
          %s1103 = ssub.s32 128, 128
          %1104 = vsyncadd %s1095, %s1103
          %s1105 = sadd.s32 %s41, %s40
          %s1106 = smul.addr %s1105, 128
          %s1107 = scalar_lea.hbm %s12, %s1106
          %s1109 = sshll.u32 %s1098, 4
          %s1110 = int_to_ptr.vmem [resolvable:$true] %s1109
          %1112 = dma.vmem_to_hbm [thread:$0]  %s1110, 128, %s1107, %s1095
        $region88: #{tpu_custom_call.1} parent=63 // pred_fallthru
          _
      $region64: #{tpu_custom_call.1} parent=5 // pred_fallthru
        _
      %p1113 = scmp.le.s32.totalorder 2, %s31
      // Predicated region
      $region89: #{tpu_custom_call.1} parent=5 // pred_check
        %p1114 = pneg %p1113
      $region90: #{tpu_custom_call.1} parent=5 // pred_check_branch
        %1116 = sbr.rel (%p1114) target = $region92
      $region91: #{tpu_custom_call.1} parent=5 // pred_region
        %s1117 = ssub.s32 %s31, 2
        // Predicated region
        $region93: #{tpu_custom_call.1} parent=91 // pred_check
          %p1118 = pneg %p362
        $region94: #{tpu_custom_call.1} parent=91 // pred_check_branch
          %1120 = sbr.rel (%p1118) target = $region96
        $region95: #{tpu_custom_call.1} parent=91 // pred_region
          %s1121 = sand.u32 %s347, 1
          %s1122 = scalar_lea.sflag [#allocation6], %s1121
          %s1123 = sand.u32 %s347, 1
          %s1124 = smul.addr %s1123, 8
          %s1125 = scalar_lea.vmem [#allocation10], %s1124
          %1126 = dma.done %s1122, 128
        $region96: #{tpu_custom_call.1} parent=91 // pred_fallthru
          _
      $region92: #{tpu_custom_call.1} parent=5 // pred_fallthru
        _
    $region6: #{tpu_custom_call.1} parent=1 // loop_footer
      %s35 = sadd.s32 1, %s31
    $region7: #{tpu_custom_call.1} parent=1 // loop_footer_branch
      %30 = sbr.rel target = $region3
    $region8: #{tpu_custom_call.1} parent=1 // loop_exit
      _
    %1127 = vsyncpa [#allocation5], 1
    %s1128 = scalar_lea.sflag [#allocation5], 1
    %1129 = vsyncpa %s1128, 1
    %1130 = vsyncpa [#allocation8], 1
    %s1131 = scalar_lea.sflag [#allocation8], 1
    %1132 = vsyncpa %s1131, 1
    %1133 = vsyncpa [#allocation6], 1
    %s1134 = scalar_lea.sflag [#allocation6], 1
    %1135 = vsyncpa %s1134, 1

</llo_original>
